<compile_context>
chip_gen: v6e
topology: v6e:2x2x1
jax: 0.10.0
libtpu: 0.0.40
codegen_flags: <defaults>
</compile_context>

<pallas_src>
import functools

import numpy as np
import jax
import jax.numpy as jnp
from jax import lax
from jax.experimental import pallas as pl
from jax.experimental.pallas import tpu as pltpu

EPS = 1e-5  # nn.GroupNorm default eps


def msef_kernel(x_ref, gamma_ref, beta_ref, dww_ref, dwb_ref,
                pww_ref, pwb_ref, sew_ref, seb_ref, o_ref,
                *, bt, H, W, C):
    WC = W * C
    inv_n = 1.0 / (H * W * C)
    inv_hw = 1.0 / (H * W)

    # ---- parameters: load once, shared across the batch tile ----
    gamma = gamma_ref[...]                      # (1, W*C)  GroupNorm weight (tiled over W)
    beta = beta_ref[...]                        # (1, W*C)  GroupNorm bias
    dwb = dwb_ref[...]                          # (1, W*C)  depthwise bias
    pwb = pwb_ref[...]                          # (1, W*C)  pointwise bias
    seb = seb_ref[...]                          # (1, C)    SE conv bias
    pww = pww_ref[...]                          # (W*C, W*C) block-diag pointwise weight
    sew = sew_ref[...]                          # (C, C)    SE conv weight
    dw_taps = [dww_ref[k:k + 1, :] for k in range(9)]   # 9 x (1, W*C), hoisted

    zero_row = jnp.zeros((1, WC), jnp.float32)  # dy padding row
    zero_col = jnp.zeros((H, C), jnp.float32)   # dx padding lane-block

    def shift_h(v, dy):                         # out[h, :] = v[h + dy, :], zero-padded
        if dy == 0:
            return v
        if dy > 0:
            return jnp.concatenate([v[1:, :], zero_row], axis=0)
        return jnp.concatenate([zero_row, v[:-1, :]], axis=0)

    def shift_w(v, dx):                         # out[:, w*C+c] = v[:, (w+dx)*C+c], zero-padded
        if dx == 0:
            return v
        if dx > 0:
            return jnp.concatenate([v[:, C:], zero_col], axis=1)
        return jnp.concatenate([zero_col, v[:, :WC - C]], axis=1)

    for b in range(bt):                         # statically unrolled over the batch tile
        r0 = b * H
        xb = x_ref[r0:r0 + H, :]                # (H, W*C) one sample, lane-dense view

        # ---- FastNorm = GroupNorm(1): per-sample stats in a single pass ----
        s1 = jnp.sum(xb)
        s2 = jnp.sum(xb * xb)
        mean = s1 * inv_n
        var = s2 * inv_n - mean * mean
        xn = (xb - mean) * lax.rsqrt(var + EPS) * gamma + beta

        # ---- depthwise 3x3, padding=1: 9 in-register shifted taps ----
        acc = jnp.zeros((H, WC), jnp.float32)
        for dy in (-1, 0, 1):
            rows = shift_h(xn, dy)
            for dx in (-1, 0, 1):
                k = (dy + 1) * 3 + (dx + 1)
                acc = acc + shift_w(rows, dx) * dw_taps[k]
        dw_out = acc + dwb                      # (H, W*C)

        # ---- pointwise 1x1 conv (C -> C): one lane-dense MXU matmul ----
        # pww = kron(I_W, pw_w) is block-diagonal, so the fused layout is kept.
        x1 = jnp.dot(dw_out, pww, preferred_element_type=jnp.float32) + pwb

        # ---- SE block: global avg pool -> 1x1 conv -> sigmoid -> gate x_norm ----
        col_sum = jnp.sum(xn, axis=0, keepdims=True)          # (1, W*C) sum over H
        pooled = jnp.zeros((1, C), jnp.float32)
        for w in range(W):                                    # fold W -> per-channel sum
            pooled = pooled + col_sum[:, w * C:(w + 1) * C]
        pooled = pooled * inv_hw                              # (1, C) global avg pool
        y = jax.nn.sigmoid(
            jnp.dot(pooled, sew, preferred_element_type=jnp.float32) + seb)  # (1, C)
        gate = jnp.concatenate([y] * W, axis=1)               # (1, W*C) broadcast over W

        # ---- residual fuse: x + x1 * (x_norm * gate); unmasked 512-lane store ----
        o_ref[r0:r0 + H, :] = xb + x1 * (xn * gate)


def msef_block(x_nhwc, params, *, batch_tile=None):
    """MSEFBlock forward.  x_nhwc: (B, H, W, C) float32."""
    B, H, W, C = x_nhwc.shape
    WC = W * C
    bt = B if batch_tile is None else batch_tile
    assert B % bt == 0
    gamma, beta, dw_w, dw_b, pw_w, pw_b, se_w, se_b = params

    # Lane-dense layout plumbing (wrapper-side: free reshape + tiny weight tiling).
    x2d = x_nhwc.reshape(B * H, WC)

    def tile_c(v):                                            # (1, C) -> (1, W*C)
        return jnp.tile(v.reshape(1, C), (1, W))

    gamma_t = tile_c(gamma)
    beta_t = tile_c(beta)
    dwb_t = tile_c(dw_b)
    pwb_t = tile_c(pw_b)
    dww_t = jnp.tile(dw_w, (1, W))                            # (9, W*C)
    pww_big = jnp.kron(jnp.eye(W, dtype=pw_w.dtype), pw_w)    # (W*C, W*C) block-diagonal
    seb_t = se_b.reshape(1, C)

    kernel = functools.partial(msef_kernel, bt=bt, H=H, W=W, C=C)

    def full(shape):
        return pl.BlockSpec(shape, lambda i: (0, 0))

    out2d = pl.pallas_call(
        kernel,
        out_shape=jax.ShapeDtypeStruct((B * H, WC), x_nhwc.dtype),
        grid=(B // bt,),
        in_specs=[
            pl.BlockSpec((bt * H, WC), lambda i: (i, 0)),     # x (lane-dense view)
            full((1, WC)),    # gamma
            full((1, WC)),    # beta
            full((9, WC)),    # depthwise 3x3 weights
            full((1, WC)),    # depthwise bias
            full((WC, WC)),   # block-diag pointwise weight
            full((1, WC)),    # pointwise bias
            full((C, C)),     # SE conv weight
            full((1, C)),     # SE conv bias
        ],
        out_specs=pl.BlockSpec((bt * H, WC), lambda i: (i, 0)),
        compiler_params=pltpu.CompilerParams(
            dimension_semantics=("parallel",)),               # batch tiles across TCs (v7x)
    )(x2d, gamma_t, beta_t, dww_t, dwb_t, pww_big, pwb_t, se_w, seb_t)
    return out2d.reshape(B, H, W, C)


def msef_ref(x, params):
    """Pure-JAX reference (NHWC), mirrors the PyTorch forward semantics."""
    gamma, beta, dw_w, dw_b, pw_w, pw_b, se_w, se_b = params
    B, H, W, C = x.shape
    mean = x.mean(axis=(1, 2, 3), keepdims=True)
    var = ((x - mean) ** 2).mean(axis=(1, 2, 3), keepdims=True)
    xn = (x - mean) / jnp.sqrt(var + EPS) * gamma.reshape(1, 1, 1, C) \
        + beta.reshape(1, 1, 1, C)
    xpad = jnp.pad(xn, ((0, 0), (1, 1), (1, 1), (0, 0)))
    acc = jnp.zeros_like(xn)
    for dy in range(3):
        for dx in range(3):
            acc = acc + xpad[:, dy:dy + H, dx:dx + W, :] * dw_w[dy * 3 + dx].reshape(1, 1, 1, C)
    dw_out = acc + dw_b.reshape(1, 1, 1, C)
    x1 = (dw_out.reshape(B, H * W, C) @ pw_w + pw_b).reshape(B, H, W, C)
    pooled = xn.mean(axis=(1, 2))                       # (B, C)
    y = jax.nn.sigmoid(pooled @ se_w + se_b)            # (B, C)
    x2 = xn * y[:, None, None, :]
    return x + x1 * x2


if __name__ == "__main__":
    B, C, H, W = 2, 32, 16, 16   # ColEn(filters=16) -> fuse = MSEFBlock(32)

    key = jax.random.PRNGKey(0)
    keys = jax.random.split(key, 9)

    # Input in PyTorch NCHW, then transposed to the kernel's NHWC layout.
    x_nchw = jax.random.normal(keys[0], (B, C, H, W), jnp.float32)
    x = jnp.transpose(x_nchw, (0, 2, 3, 1))

    # Deterministic synthetic parameters (shapes follow the module __init__).
    gamma = 1.0 + 0.1 * jax.random.normal(keys[1], (1, C), jnp.float32)     # GroupNorm weight
    beta = 0.1 * jax.random.normal(keys[2], (1, C), jnp.float32)            # GroupNorm bias
    dw_w = 0.2 * jax.random.normal(keys[3], (9, C), jnp.float32)            # depthwise (3,3) per-channel
    dw_b = 0.1 * jax.random.normal(keys[4], (1, C), jnp.float32)
    pw_w = jax.random.normal(keys[5], (C, C), jnp.float32) / jnp.sqrt(C)    # pointwise (C_in, C_out)
    pw_b = 0.1 * jax.random.normal(keys[6], (1, C), jnp.float32)
    se_w = jax.random.normal(keys[7], (C, C), jnp.float32) / jnp.sqrt(C)    # SE 1x1 conv (C_in, C_out)
    se_b = 0.1 * jax.random.normal(keys[8], (1, C), jnp.float32)
    params = (gamma, beta, dw_w, dw_b, pw_w, pw_b, se_w, se_b)

    out = msef_block(x, params)
    out = jax.block_until_ready(out)

    ref = msef_ref(x, params)
    err = float(jnp.max(jnp.abs(out - ref)))
    assert np.allclose(np.asarray(out), np.asarray(ref), atol=1e-4, rtol=1e-4), err

    print("KERNEL_OK")
</pallas_src>

<mosaic_0001>
module attributes {stable_mosaic.version = 11 : i64} {
  func.func @msef_kernel(%arg0: i32, %arg1: memref<32x512xf32, #tpu.memory_space<vmem>>, %arg2: memref<1x512xf32, #tpu.memory_space<vmem>>, %arg3: memref<1x512xf32, #tpu.memory_space<vmem>>, %arg4: memref<9x512xf32, #tpu.memory_space<vmem>>, %arg5: memref<1x512xf32, #tpu.memory_space<vmem>>, %arg6: memref<512x512xf32, #tpu.memory_space<vmem>>, %arg7: memref<1x512xf32, #tpu.memory_space<vmem>>, %arg8: memref<32x32xf32, #tpu.memory_space<vmem>>, %arg9: memref<1x32xf32, #tpu.memory_space<vmem>>, %arg10: memref<32x512xf32, #tpu.memory_space<vmem>>) attributes {dimension_semantics = [#tpu.dimension_semantics<parallel>], iteration_bounds = array<i64: 1>, scalar_prefetch = 0 : i64, scratch_operands = 0 : i64, tpu.core_type = #tpu.core_type<tc>, window_params = [{transform_indices = @transform_0, window_bounds = array<i64: 32, 512>}, {pipeline_mode = #tpu.pipeline_mode<synchronous>, transform_indices = @transform_1, window_bounds = array<i64: 1, 512>}, {pipeline_mode = #tpu.pipeline_mode<synchronous>, transform_indices = @transform_2, window_bounds = array<i64: 1, 512>}, {pipeline_mode = #tpu.pipeline_mode<synchronous>, transform_indices = @transform_3, window_bounds = array<i64: 9, 512>}, {pipeline_mode = #tpu.pipeline_mode<synchronous>, transform_indices = @transform_4, window_bounds = array<i64: 1, 512>}, {pipeline_mode = #tpu.pipeline_mode<synchronous>, transform_indices = @transform_5, window_bounds = array<i64: 512, 512>}, {pipeline_mode = #tpu.pipeline_mode<synchronous>, transform_indices = @transform_6, window_bounds = array<i64: 1, 512>}, {pipeline_mode = #tpu.pipeline_mode<synchronous>, transform_indices = @transform_7, window_bounds = array<i64: 32, 32>}, {pipeline_mode = #tpu.pipeline_mode<synchronous>, transform_indices = @transform_8, window_bounds = array<i64: 1, 32>}, {transform_indices = @transform_9, window_bounds = array<i64: 32, 512>}]} {
    %c0 = arith.constant 0 : index
    %c0_0 = arith.constant 0 : index
    %0 = vector.load %arg2[%c0, %c0_0] : memref<1x512xf32, #tpu.memory_space<vmem>>, vector<1x512xf32>
    %c0_1 = arith.constant 0 : index
    %c0_2 = arith.constant 0 : index
    %1 = vector.load %arg3[%c0_1, %c0_2] : memref<1x512xf32, #tpu.memory_space<vmem>>, vector<1x512xf32>
    %c0_3 = arith.constant 0 : index
    %c0_4 = arith.constant 0 : index
    %2 = vector.load %arg5[%c0_3, %c0_4] : memref<1x512xf32, #tpu.memory_space<vmem>>, vector<1x512xf32>
    %c0_5 = arith.constant 0 : index
    %c0_6 = arith.constant 0 : index
    %3 = vector.load %arg7[%c0_5, %c0_6] : memref<1x512xf32, #tpu.memory_space<vmem>>, vector<1x512xf32>
    %c0_7 = arith.constant 0 : index
    %c0_8 = arith.constant 0 : index
    %4 = vector.load %arg9[%c0_7, %c0_8] : memref<1x32xf32, #tpu.memory_space<vmem>>, vector<1x32xf32>
    %c0_9 = arith.constant 0 : index
    %c0_10 = arith.constant 0 : index
    %5 = vector.load %arg6[%c0_9, %c0_10] : memref<512x512xf32, #tpu.memory_space<vmem>>, vector<512x512xf32>
    %c0_11 = arith.constant 0 : index
    %c0_12 = arith.constant 0 : index
    %6 = vector.load %arg8[%c0_11, %c0_12] : memref<32x32xf32, #tpu.memory_space<vmem>>, vector<32x32xf32>
    %c0_13 = arith.constant 0 : index
    %c0_14 = arith.constant 0 : index
    %7 = vector.load %arg4[%c0_13, %c0_14] : memref<9x512xf32, #tpu.memory_space<vmem>>, vector<1x512xf32>
    %c1 = arith.constant 1 : index
    %c0_15 = arith.constant 0 : index
    %8 = vector.load %arg4[%c1, %c0_15] : memref<9x512xf32, #tpu.memory_space<vmem>>, vector<1x512xf32>
    %c2 = arith.constant 2 : index
    %c0_16 = arith.constant 0 : index
    %9 = vector.load %arg4[%c2, %c0_16] : memref<9x512xf32, #tpu.memory_space<vmem>>, vector<1x512xf32>
    %c3 = arith.constant 3 : index
    %c0_17 = arith.constant 0 : index
    %10 = vector.load %arg4[%c3, %c0_17] : memref<9x512xf32, #tpu.memory_space<vmem>>, vector<1x512xf32>
    %c4 = arith.constant 4 : index
    %c0_18 = arith.constant 0 : index
    %11 = vector.load %arg4[%c4, %c0_18] : memref<9x512xf32, #tpu.memory_space<vmem>>, vector<1x512xf32>
    %c5 = arith.constant 5 : index
    %c0_19 = arith.constant 0 : index
    %12 = vector.load %arg4[%c5, %c0_19] : memref<9x512xf32, #tpu.memory_space<vmem>>, vector<1x512xf32>
    %c6 = arith.constant 6 : index
    %c0_20 = arith.constant 0 : index
    %13 = vector.load %arg4[%c6, %c0_20] : memref<9x512xf32, #tpu.memory_space<vmem>>, vector<1x512xf32>
    %c7 = arith.constant 7 : index
    %c0_21 = arith.constant 0 : index
    %14 = vector.load %arg4[%c7, %c0_21] : memref<9x512xf32, #tpu.memory_space<vmem>>, vector<1x512xf32>
    %c8 = arith.constant 8 : index
    %c0_22 = arith.constant 0 : index
    %15 = vector.load %arg4[%c8, %c0_22] : memref<9x512xf32, #tpu.memory_space<vmem>>, vector<1x512xf32>
    %cst = arith.constant 0.000000e+00 : f32
    %16 = vector.broadcast %cst : f32 to vector<1x512xf32>
    %cst_23 = arith.constant 0.000000e+00 : f32
    %17 = vector.broadcast %cst_23 : f32 to vector<16x32xf32>
    %c0_24 = arith.constant 0 : index
    %c0_25 = arith.constant 0 : index
    %18 = vector.load %arg1[%c0_24, %c0_25] : memref<32x512xf32, #tpu.memory_space<vmem>>, vector<16x512xf32>
    %19 = vector.shape_cast %18 : vector<16x512xf32> to vector<1x16x512xf32>
    %cst_26 = arith.constant dense<0.000000e+00> : vector<1xf32>
    %20 = vector.multi_reduction <add>, %19, %cst_26 [1, 2] : vector<1x16x512xf32> to vector<1xf32>
    %21 = vector.shape_cast %20 : vector<1xf32> to vector<1x1x1xf32>
    %22 = vector.extract %21[0, 0, 0] : f32 from vector<1x1x1xf32>
    %23 = arith.mulf %18, %18 : vector<16x512xf32>
    %24 = vector.shape_cast %23 : vector<16x512xf32> to vector<1x16x512xf32>
    %cst_27 = arith.constant dense<0.000000e+00> : vector<1xf32>
    %25 = vector.multi_reduction <add>, %24, %cst_27 [1, 2] : vector<1x16x512xf32> to vector<1xf32>
    %26 = vector.shape_cast %25 : vector<1xf32> to vector<1x1x1xf32>
    %27 = vector.extract %26[0, 0, 0] : f32 from vector<1x1x1xf32>
    %cst_28 = arith.constant 1.22070313E-4 : f32
    %28 = arith.mulf %22, %cst_28 : f32
    %cst_29 = arith.constant 1.22070313E-4 : f32
    %29 = arith.mulf %27, %cst_29 : f32
    %30 = arith.mulf %28, %28 : f32
    %31 = arith.subf %29, %30 : f32
    %32 = vector.broadcast %28 : f32 to vector<16x512xf32>
    %33 = arith.subf %18, %32 : vector<16x512xf32>
    %cst_30 = arith.constant 9.99999974E-6 : f32
    %34 = arith.addf %31, %cst_30 : f32
    %35 = math.rsqrt %34 : f32
    %36 = vector.broadcast %35 : f32 to vector<16x512xf32>
    %37 = arith.mulf %33, %36 : vector<16x512xf32>
    %38 = vector.broadcast %0 : vector<1x512xf32> to vector<16x512xf32>
    %39 = arith.mulf %37, %38 : vector<16x512xf32>
    %40 = vector.broadcast %1 : vector<1x512xf32> to vector<16x512xf32>
    %41 = arith.addf %39, %40 : vector<16x512xf32>
    %cst_31 = arith.constant 0.000000e+00 : f32
    %42 = vector.broadcast %cst_31 : f32 to vector<16x512xf32>
    %43 = vector.extract_strided_slice %41 {offsets = [0, 0], sizes = [15, 512], strides = [1, 1]} : vector<16x512xf32> to vector<15x512xf32>
    %44 = tpu.concatenate %16, %43 in 0 : vector<1x512xf32>, vector<15x512xf32> -> vector<16x512xf32>
    %45 = vector.extract_strided_slice %44 {offsets = [0, 0], sizes = [16, 480], strides = [1, 1]} : vector<16x512xf32> to vector<16x480xf32>
    %46 = tpu.concatenate %17, %45 in 1 : vector<16x32xf32>, vector<16x480xf32> -> vector<16x512xf32>
    %47 = vector.broadcast %7 : vector<1x512xf32> to vector<16x512xf32>
    %48 = arith.mulf %46, %47 : vector<16x512xf32>
    %49 = arith.addf %42, %48 : vector<16x512xf32>
    %50 = vector.broadcast %8 : vector<1x512xf32> to vector<16x512xf32>
    %51 = arith.mulf %44, %50 : vector<16x512xf32>
    %52 = arith.addf %49, %51 : vector<16x512xf32>
    %53 = vector.extract_strided_slice %44 {offsets = [0, 32], sizes = [16, 480], strides = [1, 1]} : vector<16x512xf32> to vector<16x480xf32>
    %54 = tpu.concatenate %53, %17 in 1 : vector<16x480xf32>, vector<16x32xf32> -> vector<16x512xf32>
    %55 = vector.broadcast %9 : vector<1x512xf32> to vector<16x512xf32>
    %56 = arith.mulf %54, %55 : vector<16x512xf32>
    %57 = arith.addf %52, %56 : vector<16x512xf32>
    %58 = vector.extract_strided_slice %41 {offsets = [0, 0], sizes = [16, 480], strides = [1, 1]} : vector<16x512xf32> to vector<16x480xf32>
    %59 = tpu.concatenate %17, %58 in 1 : vector<16x32xf32>, vector<16x480xf32> -> vector<16x512xf32>
    %60 = vector.broadcast %10 : vector<1x512xf32> to vector<16x512xf32>
    %61 = arith.mulf %59, %60 : vector<16x512xf32>
    %62 = arith.addf %57, %61 : vector<16x512xf32>
    %63 = vector.broadcast %11 : vector<1x512xf32> to vector<16x512xf32>
    %64 = arith.mulf %41, %63 : vector<16x512xf32>
    %65 = arith.addf %62, %64 : vector<16x512xf32>
    %66 = vector.extract_strided_slice %41 {offsets = [0, 32], sizes = [16, 480], strides = [1, 1]} : vector<16x512xf32> to vector<16x480xf32>
    %67 = tpu.concatenate %66, %17 in 1 : vector<16x480xf32>, vector<16x32xf32> -> vector<16x512xf32>
    %68 = vector.broadcast %12 : vector<1x512xf32> to vector<16x512xf32>
    %69 = arith.mulf %67, %68 : vector<16x512xf32>
    %70 = arith.addf %65, %69 : vector<16x512xf32>
    %71 = vector.extract_strided_slice %41 {offsets = [1, 0], sizes = [15, 512], strides = [1, 1]} : vector<16x512xf32> to vector<15x512xf32>
    %72 = tpu.concatenate %71, %16 in 0 : vector<15x512xf32>, vector<1x512xf32> -> vector<16x512xf32>
    %73 = vector.extract_strided_slice %72 {offsets = [0, 0], sizes = [16, 480], strides = [1, 1]} : vector<16x512xf32> to vector<16x480xf32>
    %74 = tpu.concatenate %17, %73 in 1 : vector<16x32xf32>, vector<16x480xf32> -> vector<16x512xf32>
    %75 = vector.broadcast %13 : vector<1x512xf32> to vector<16x512xf32>
    %76 = arith.mulf %74, %75 : vector<16x512xf32>
    %77 = arith.addf %70, %76 : vector<16x512xf32>
    %78 = vector.broadcast %14 : vector<1x512xf32> to vector<16x512xf32>
    %79 = arith.mulf %72, %78 : vector<16x512xf32>
    %80 = arith.addf %77, %79 : vector<16x512xf32>
    %81 = vector.extract_strided_slice %72 {offsets = [0, 32], sizes = [16, 480], strides = [1, 1]} : vector<16x512xf32> to vector<16x480xf32>
    %82 = tpu.concatenate %81, %17 in 1 : vector<16x480xf32>, vector<16x32xf32> -> vector<16x512xf32>
    %83 = vector.broadcast %15 : vector<1x512xf32> to vector<16x512xf32>
    %84 = arith.mulf %82, %83 : vector<16x512xf32>
    %85 = arith.addf %80, %84 : vector<16x512xf32>
    %86 = vector.broadcast %2 : vector<1x512xf32> to vector<16x512xf32>
    %87 = arith.addf %85, %86 : vector<16x512xf32>
    %cst_32 = arith.constant dense<0.000000e+00> : vector<16x512xf32>
    %88 = tpu.matmul %87, %5, %cst_32 {dimension_numbers = #tpu.dot_dimension_numbers<[1], [0], [0], [1], [0, 0, 1, 1], [], []>} : vector<16x512xf32>, vector<512x512xf32>, vector<16x512xf32> -> vector<16x512xf32>
    %89 = vector.broadcast %3 : vector<1x512xf32> to vector<16x512xf32>
    %90 = arith.addf %88, %89 : vector<16x512xf32>
    %cst_33 = arith.constant dense<0.000000e+00> : vector<512xf32>
    %91 = vector.multi_reduction <add>, %41, %cst_33 [0] : vector<16x512xf32> to vector<512xf32>
    %92 = vector.shape_cast %91 : vector<512xf32> to vector<1x512xf32>
    %cst_34 = arith.constant 0.000000e+00 : f32
    %93 = vector.broadcast %cst_34 : f32 to vector<1x32xf32>
    %94 = vector.extract_strided_slice %92 {offsets = [0, 0], sizes = [1, 32], strides = [1, 1]} : vector<1x512xf32> to vector<1x32xf32>
    %95 = arith.addf %93, %94 : vector<1x32xf32>
    %96 = vector.extract_strided_slice %92 {offsets = [0, 32], sizes = [1, 32], strides = [1, 1]} : vector<1x512xf32> to vector<1x32xf32>
    %97 = arith.addf %95, %96 : vector<1x32xf32>
    %98 = vector.extract_strided_slice %92 {offsets = [0, 64], sizes = [1, 32], strides = [1, 1]} : vector<1x512xf32> to vector<1x32xf32>
    %99 = arith.addf %97, %98 : vector<1x32xf32>
    %100 = vector.extract_strided_slice %92 {offsets = [0, 96], sizes = [1, 32], strides = [1, 1]} : vector<1x512xf32> to vector<1x32xf32>
    %101 = arith.addf %99, %100 : vector<1x32xf32>
    %102 = vector.extract_strided_slice %92 {offsets = [0, 128], sizes = [1, 32], strides = [1, 1]} : vector<1x512xf32> to vector<1x32xf32>
    %103 = arith.addf %101, %102 : vector<1x32xf32>
    %104 = vector.extract_strided_slice %92 {offsets = [0, 160], sizes = [1, 32], strides = [1, 1]} : vector<1x512xf32> to vector<1x32xf32>
    %105 = arith.addf %103, %104 : vector<1x32xf32>
    %106 = vector.extract_strided_slice %92 {offsets = [0, 192], sizes = [1, 32], strides = [1, 1]} : vector<1x512xf32> to vector<1x32xf32>
    %107 = arith.addf %105, %106 : vector<1x32xf32>
    %108 = vector.extract_strided_slice %92 {offsets = [0, 224], sizes = [1, 32], strides = [1, 1]} : vector<1x512xf32> to vector<1x32xf32>
    %109 = arith.addf %107, %108 : vector<1x32xf32>
    %110 = vector.extract_strided_slice %92 {offsets = [0, 256], sizes = [1, 32], strides = [1, 1]} : vector<1x512xf32> to vector<1x32xf32>
    %111 = arith.addf %109, %110 : vector<1x32xf32>
    %112 = vector.extract_strided_slice %92 {offsets = [0, 288], sizes = [1, 32], strides = [1, 1]} : vector<1x512xf32> to vector<1x32xf32>
    %113 = arith.addf %111, %112 : vector<1x32xf32>
    %114 = vector.extract_strided_slice %92 {offsets = [0, 320], sizes = [1, 32], strides = [1, 1]} : vector<1x512xf32> to vector<1x32xf32>
    %115 = arith.addf %113, %114 : vector<1x32xf32>
    %116 = vector.extract_strided_slice %92 {offsets = [0, 352], sizes = [1, 32], strides = [1, 1]} : vector<1x512xf32> to vector<1x32xf32>
    %117 = arith.addf %115, %116 : vector<1x32xf32>
    %118 = vector.extract_strided_slice %92 {offsets = [0, 384], sizes = [1, 32], strides = [1, 1]} : vector<1x512xf32> to vector<1x32xf32>
    %119 = arith.addf %117, %118 : vector<1x32xf32>
    %120 = vector.extract_strided_slice %92 {offsets = [0, 416], sizes = [1, 32], strides = [1, 1]} : vector<1x512xf32> to vector<1x32xf32>
    %121 = arith.addf %119, %120 : vector<1x32xf32>
    %122 = vector.extract_strided_slice %92 {offsets = [0, 448], sizes = [1, 32], strides = [1, 1]} : vector<1x512xf32> to vector<1x32xf32>
    %123 = arith.addf %121, %122 : vector<1x32xf32>
    %124 = vector.extract_strided_slice %92 {offsets = [0, 480], sizes = [1, 32], strides = [1, 1]} : vector<1x512xf32> to vector<1x32xf32>
    %125 = arith.addf %123, %124 : vector<1x32xf32>
    %cst_35 = arith.constant 3.906250e-03 : f32
    %126 = vector.broadcast %cst_35 : f32 to vector<1x32xf32>
    %127 = arith.mulf %125, %126 : vector<1x32xf32>
    %cst_36 = arith.constant dense<0.000000e+00> : vector<1x32xf32>
    %128 = tpu.matmul %127, %6, %cst_36 {dimension_numbers = #tpu.dot_dimension_numbers<[1], [0], [0], [1], [0, 0, 1, 1], [], []>} : vector<1x32xf32>, vector<32x32xf32>, vector<1x32xf32> -> vector<1x32xf32>
    %129 = arith.addf %128, %4 : vector<1x32xf32>
    %130 = arith.negf %129 : vector<1x32xf32>
    %131 = math.exp %130 : vector<1x32xf32>
    %cst_37 = arith.constant 1.000000e+00 : f32
    %132 = vector.broadcast %cst_37 : f32 to vector<1x32xf32>
    %133 = arith.addf %132, %131 : vector<1x32xf32>
    %134 = arith.divf %132, %133 : vector<1x32xf32>
    %135 = tpu.concatenate %134, %134, %134, %134, %134, %134, %134, %134, %134, %134, %134, %134, %134, %134, %134, %134 in 1 : vector<1x32xf32>, vector<1x32xf32>, vector<1x32xf32>, vector<1x32xf32>, vector<1x32xf32>, vector<1x32xf32>, vector<1x32xf32>, vector<1x32xf32>, vector<1x32xf32>, vector<1x32xf32>, vector<1x32xf32>, vector<1x32xf32>, vector<1x32xf32>, vector<1x32xf32>, vector<1x32xf32>, vector<1x32xf32> -> vector<1x512xf32>
    %136 = vector.broadcast %135 : vector<1x512xf32> to vector<16x512xf32>
    %137 = arith.mulf %41, %136 : vector<16x512xf32>
    %138 = arith.mulf %90, %137 : vector<16x512xf32>
    %139 = arith.addf %18, %138 : vector<16x512xf32>
    %c0_38 = arith.constant 0 : index
    %c0_39 = arith.constant 0 : index
    %140 = vector.load %arg10[%c0_38, %c0_39] : memref<32x512xf32, #tpu.memory_space<vmem>>, vector<16x512xf32>
    tpu.vector_store %arg10[%c0_38, %c0_39], %139 {strides = array<i32>} : memref<32x512xf32, #tpu.memory_space<vmem>>, vector<16x512xf32>,
    %c16 = arith.constant 16 : index
    %c0_40 = arith.constant 0 : index
    %141 = vector.load %arg1[%c16, %c0_40] : memref<32x512xf32, #tpu.memory_space<vmem>>, vector<16x512xf32>
    %142 = vector.shape_cast %141 : vector<16x512xf32> to vector<1x16x512xf32>
    %cst_41 = arith.constant dense<0.000000e+00> : vector<1xf32>
    %143 = vector.multi_reduction <add>, %142, %cst_41 [1, 2] : vector<1x16x512xf32> to vector<1xf32>
    %144 = vector.shape_cast %143 : vector<1xf32> to vector<1x1x1xf32>
    %145 = vector.extract %144[0, 0, 0] : f32 from vector<1x1x1xf32>
    %146 = arith.mulf %141, %141 : vector<16x512xf32>
    %147 = vector.shape_cast %146 : vector<16x512xf32> to vector<1x16x512xf32>
    %cst_42 = arith.constant dense<0.000000e+00> : vector<1xf32>
    %148 = vector.multi_reduction <add>, %147, %cst_42 [1, 2] : vector<1x16x512xf32> to vector<1xf32>
    %149 = vector.shape_cast %148 : vector<1xf32> to vector<1x1x1xf32>
    %150 = vector.extract %149[0, 0, 0] : f32 from vector<1x1x1xf32>
    %cst_43 = arith.constant 1.22070313E-4 : f32
    %151 = arith.mulf %145, %cst_43 : f32
    %cst_44 = arith.constant 1.22070313E-4 : f32
    %152 = arith.mulf %150, %cst_44 : f32
    %153 = arith.mulf %151, %151 : f32
    %154 = arith.subf %152, %153 : f32
    %155 = vector.broadcast %151 : f32 to vector<16x512xf32>
    %156 = arith.subf %141, %155 : vector<16x512xf32>
    %cst_45 = arith.constant 9.99999974E-6 : f32
    %157 = arith.addf %154, %cst_45 : f32
    %158 = math.rsqrt %157 : f32
    %159 = vector.broadcast %158 : f32 to vector<16x512xf32>
    %160 = arith.mulf %156, %159 : vector<16x512xf32>
    %161 = vector.broadcast %0 : vector<1x512xf32> to vector<16x512xf32>
    %162 = arith.mulf %160, %161 : vector<16x512xf32>
    %163 = vector.broadcast %1 : vector<1x512xf32> to vector<16x512xf32>
    %164 = arith.addf %162, %163 : vector<16x512xf32>
    %cst_46 = arith.constant 0.000000e+00 : f32
    %165 = vector.broadcast %cst_46 : f32 to vector<16x512xf32>
    %166 = vector.extract_strided_slice %164 {offsets = [0, 0], sizes = [15, 512], strides = [1, 1]} : vector<16x512xf32> to vector<15x512xf32>
    %167 = tpu.concatenate %16, %166 in 0 : vector<1x512xf32>, vector<15x512xf32> -> vector<16x512xf32>
    %168 = vector.extract_strided_slice %167 {offsets = [0, 0], sizes = [16, 480], strides = [1, 1]} : vector<16x512xf32> to vector<16x480xf32>
    %169 = tpu.concatenate %17, %168 in 1 : vector<16x32xf32>, vector<16x480xf32> -> vector<16x512xf32>
    %170 = vector.broadcast %7 : vector<1x512xf32> to vector<16x512xf32>
    %171 = arith.mulf %169, %170 : vector<16x512xf32>
    %172 = arith.addf %165, %171 : vector<16x512xf32>
    %173 = vector.broadcast %8 : vector<1x512xf32> to vector<16x512xf32>
    %174 = arith.mulf %167, %173 : vector<16x512xf32>
    %175 = arith.addf %172, %174 : vector<16x512xf32>
    %176 = vector.extract_strided_slice %167 {offsets = [0, 32], sizes = [16, 480], strides = [1, 1]} : vector<16x512xf32> to vector<16x480xf32>
    %177 = tpu.concatenate %176, %17 in 1 : vector<16x480xf32>, vector<16x32xf32> -> vector<16x512xf32>
    %178 = vector.broadcast %9 : vector<1x512xf32> to vector<16x512xf32>
    %179 = arith.mulf %177, %178 : vector<16x512xf32>
    %180 = arith.addf %175, %179 : vector<16x512xf32>
    %181 = vector.extract_strided_slice %164 {offsets = [0, 0], sizes = [16, 480], strides = [1, 1]} : vector<16x512xf32> to vector<16x480xf32>
    %182 = tpu.concatenate %17, %181 in 1 : vector<16x32xf32>, vector<16x480xf32> -> vector<16x512xf32>
    %183 = vector.broadcast %10 : vector<1x512xf32> to vector<16x512xf32>
    %184 = arith.mulf %182, %183 : vector<16x512xf32>
    %185 = arith.addf %180, %184 : vector<16x512xf32>
    %186 = vector.broadcast %11 : vector<1x512xf32> to vector<16x512xf32>
    %187 = arith.mulf %164, %186 : vector<16x512xf32>
    %188 = arith.addf %185, %187 : vector<16x512xf32>
    %189 = vector.extract_strided_slice %164 {offsets = [0, 32], sizes = [16, 480], strides = [1, 1]} : vector<16x512xf32> to vector<16x480xf32>
    %190 = tpu.concatenate %189, %17 in 1 : vector<16x480xf32>, vector<16x32xf32> -> vector<16x512xf32>
    %191 = vector.broadcast %12 : vector<1x512xf32> to vector<16x512xf32>
    %192 = arith.mulf %190, %191 : vector<16x512xf32>
    %193 = arith.addf %188, %192 : vector<16x512xf32>
    %194 = vector.extract_strided_slice %164 {offsets = [1, 0], sizes = [15, 512], strides = [1, 1]} : vector<16x512xf32> to vector<15x512xf32>
    %195 = tpu.concatenate %194, %16 in 0 : vector<15x512xf32>, vector<1x512xf32> -> vector<16x512xf32>
    %196 = vector.extract_strided_slice %195 {offsets = [0, 0], sizes = [16, 480], strides = [1, 1]} : vector<16x512xf32> to vector<16x480xf32>
    %197 = tpu.concatenate %17, %196 in 1 : vector<16x32xf32>, vector<16x480xf32> -> vector<16x512xf32>
    %198 = vector.broadcast %13 : vector<1x512xf32> to vector<16x512xf32>
    %199 = arith.mulf %197, %198 : vector<16x512xf32>
    %200 = arith.addf %193, %199 : vector<16x512xf32>
    %201 = vector.broadcast %14 : vector<1x512xf32> to vector<16x512xf32>
    %202 = arith.mulf %195, %201 : vector<16x512xf32>
    %203 = arith.addf %200, %202 : vector<16x512xf32>
    %204 = vector.extract_strided_slice %195 {offsets = [0, 32], sizes = [16, 480], strides = [1, 1]} : vector<16x512xf32> to vector<16x480xf32>
    %205 = tpu.concatenate %204, %17 in 1 : vector<16x480xf32>, vector<16x32xf32> -> vector<16x512xf32>
    %206 = vector.broadcast %15 : vector<1x512xf32> to vector<16x512xf32>
    %207 = arith.mulf %205, %206 : vector<16x512xf32>
    %208 = arith.addf %203, %207 : vector<16x512xf32>
    %209 = vector.broadcast %2 : vector<1x512xf32> to vector<16x512xf32>
    %210 = arith.addf %208, %209 : vector<16x512xf32>
    %cst_47 = arith.constant dense<0.000000e+00> : vector<16x512xf32>
    %211 = tpu.matmul %210, %5, %cst_47 {dimension_numbers = #tpu.dot_dimension_numbers<[1], [0], [0], [1], [0, 0, 1, 1], [], []>} : vector<16x512xf32>, vector<512x512xf32>, vector<16x512xf32> -> vector<16x512xf32>
    %212 = vector.broadcast %3 : vector<1x512xf32> to vector<16x512xf32>
    %213 = arith.addf %211, %212 : vector<16x512xf32>
    %cst_48 = arith.constant dense<0.000000e+00> : vector<512xf32>
    %214 = vector.multi_reduction <add>, %164, %cst_48 [0] : vector<16x512xf32> to vector<512xf32>
    %215 = vector.shape_cast %214 : vector<512xf32> to vector<1x512xf32>
    %cst_49 = arith.constant 0.000000e+00 : f32
    %216 = vector.broadcast %cst_49 : f32 to vector<1x32xf32>
    %217 = vector.extract_strided_slice %215 {offsets = [0, 0], sizes = [1, 32], strides = [1, 1]} : vector<1x512xf32> to vector<1x32xf32>
    %218 = arith.addf %216, %217 : vector<1x32xf32>
    %219 = vector.extract_strided_slice %215 {offsets = [0, 32], sizes = [1, 32], strides = [1, 1]} : vector<1x512xf32> to vector<1x32xf32>
    %220 = arith.addf %218, %219 : vector<1x32xf32>
    %221 = vector.extract_strided_slice %215 {offsets = [0, 64], sizes = [1, 32], strides = [1, 1]} : vector<1x512xf32> to vector<1x32xf32>
    %222 = arith.addf %220, %221 : vector<1x32xf32>
    %223 = vector.extract_strided_slice %215 {offsets = [0, 96], sizes = [1, 32], strides = [1, 1]} : vector<1x512xf32> to vector<1x32xf32>
    %224 = arith.addf %222, %223 : vector<1x32xf32>
    %225 = vector.extract_strided_slice %215 {offsets = [0, 128], sizes = [1, 32], strides = [1, 1]} : vector<1x512xf32> to vector<1x32xf32>
    %226 = arith.addf %224, %225 : vector<1x32xf32>
    %227 = vector.extract_strided_slice %215 {offsets = [0, 160], sizes = [1, 32], strides = [1, 1]} : vector<1x512xf32> to vector<1x32xf32>
    %228 = arith.addf %226, %227 : vector<1x32xf32>
    %229 = vector.extract_strided_slice %215 {offsets = [0, 192], sizes = [1, 32], strides = [1, 1]} : vector<1x512xf32> to vector<1x32xf32>
    %230 = arith.addf %228, %229 : vector<1x32xf32>
    %231 = vector.extract_strided_slice %215 {offsets = [0, 224], sizes = [1, 32], strides = [1, 1]} : vector<1x512xf32> to vector<1x32xf32>
    %232 = arith.addf %230, %231 : vector<1x32xf32>
    %233 = vector.extract_strided_slice %215 {offsets = [0, 256], sizes = [1, 32], strides = [1, 1]} : vector<1x512xf32> to vector<1x32xf32>
    %234 = arith.addf %232, %233 : vector<1x32xf32>
    %235 = vector.extract_strided_slice %215 {offsets = [0, 288], sizes = [1, 32], strides = [1, 1]} : vector<1x512xf32> to vector<1x32xf32>
    %236 = arith.addf %234, %235 : vector<1x32xf32>
    %237 = vector.extract_strided_slice %215 {offsets = [0, 320], sizes = [1, 32], strides = [1, 1]} : vector<1x512xf32> to vector<1x32xf32>
    %238 = arith.addf %236, %237 : vector<1x32xf32>
    %239 = vector.extract_strided_slice %215 {offsets = [0, 352], sizes = [1, 32], strides = [1, 1]} : vector<1x512xf32> to vector<1x32xf32>
    %240 = arith.addf %238, %239 : vector<1x32xf32>
    %241 = vector.extract_strided_slice %215 {offsets = [0, 384], sizes = [1, 32], strides = [1, 1]} : vector<1x512xf32> to vector<1x32xf32>
    %242 = arith.addf %240, %241 : vector<1x32xf32>
    %243 = vector.extract_strided_slice %215 {offsets = [0, 416], sizes = [1, 32], strides = [1, 1]} : vector<1x512xf32> to vector<1x32xf32>
    %244 = arith.addf %242, %243 : vector<1x32xf32>
    %245 = vector.extract_strided_slice %215 {offsets = [0, 448], sizes = [1, 32], strides = [1, 1]} : vector<1x512xf32> to vector<1x32xf32>
    %246 = arith.addf %244, %245 : vector<1x32xf32>
    %247 = vector.extract_strided_slice %215 {offsets = [0, 480], sizes = [1, 32], strides = [1, 1]} : vector<1x512xf32> to vector<1x32xf32>
    %248 = arith.addf %246, %247 : vector<1x32xf32>
    %cst_50 = arith.constant 3.906250e-03 : f32
    %249 = vector.broadcast %cst_50 : f32 to vector<1x32xf32>
    %250 = arith.mulf %248, %249 : vector<1x32xf32>
    %cst_51 = arith.constant dense<0.000000e+00> : vector<1x32xf32>
    %251 = tpu.matmul %250, %6, %cst_51 {dimension_numbers = #tpu.dot_dimension_numbers<[1], [0], [0], [1], [0, 0, 1, 1], [], []>} : vector<1x32xf32>, vector<32x32xf32>, vector<1x32xf32> -> vector<1x32xf32>
    %252 = arith.addf %251, %4 : vector<1x32xf32>
    %253 = arith.negf %252 : vector<1x32xf32>
    %254 = math.exp %253 : vector<1x32xf32>
    %cst_52 = arith.constant 1.000000e+00 : f32
    %255 = vector.broadcast %cst_52 : f32 to vector<1x32xf32>
    %256 = arith.addf %255, %254 : vector<1x32xf32>
    %257 = arith.divf %255, %256 : vector<1x32xf32>
    %258 = tpu.concatenate %257, %257, %257, %257, %257, %257, %257, %257, %257, %257, %257, %257, %257, %257, %257, %257 in 1 : vector<1x32xf32>, vector<1x32xf32>, vector<1x32xf32>, vector<1x32xf32>, vector<1x32xf32>, vector<1x32xf32>, vector<1x32xf32>, vector<1x32xf32>, vector<1x32xf32>, vector<1x32xf32>, vector<1x32xf32>, vector<1x32xf32>, vector<1x32xf32>, vector<1x32xf32>, vector<1x32xf32>, vector<1x32xf32> -> vector<1x512xf32>
    %259 = vector.broadcast %258 : vector<1x512xf32> to vector<16x512xf32>
    %260 = arith.mulf %164, %259 : vector<16x512xf32>
    %261 = arith.mulf %213, %260 : vector<16x512xf32>
    %262 = arith.addf %141, %261 : vector<16x512xf32>
    %c16_53 = arith.constant 16 : index
    %c0_54 = arith.constant 0 : index
    %263 = vector.load %arg10[%c16_53, %c0_54] : memref<32x512xf32, #tpu.memory_space<vmem>>, vector<16x512xf32>
    tpu.vector_store %arg10[%c16_53, %c0_54], %262 {strides = array<i32>} : memref<32x512xf32, #tpu.memory_space<vmem>>, vector<16x512xf32>,
    return
  }
  func.func @transform_0(%arg0: i32) -> (i32, i32) {
    %c0_i32 = arith.constant 0 : i32
    %c0_i32_0 = arith.constant 0 : i32
    return %arg0, %c0_i32 : i32, i32
  }
  func.func @transform_1(%arg0: i32) -> (i32, i32) {
    %c0_i32 = arith.constant 0 : i32
    %c0_i32_0 = arith.constant 0 : i32
    %c0_i32_1 = arith.constant 0 : i32
    return %c0_i32, %c0_i32_0 : i32, i32
  }
  func.func @transform_2(%arg0: i32) -> (i32, i32) {
    %c0_i32 = arith.constant 0 : i32
    %c0_i32_0 = arith.constant 0 : i32
    %c0_i32_1 = arith.constant 0 : i32
    return %c0_i32, %c0_i32_0 : i32, i32
  }
  func.func @transform_3(%arg0: i32) -> (i32, i32) {
    %c0_i32 = arith.constant 0 : i32
    %c0_i32_0 = arith.constant 0 : i32
    %c0_i32_1 = arith.constant 0 : i32
    return %c0_i32, %c0_i32_0 : i32, i32
  }
  func.func @transform_4(%arg0: i32) -> (i32, i32) {
    %c0_i32 = arith.constant 0 : i32
    %c0_i32_0 = arith.constant 0 : i32
    %c0_i32_1 = arith.constant 0 : i32
    return %c0_i32, %c0_i32_0 : i32, i32
  }
  func.func @transform_5(%arg0: i32) -> (i32, i32) {
    %c0_i32 = arith.constant 0 : i32
    %c0_i32_0 = arith.constant 0 : i32
    %c0_i32_1 = arith.constant 0 : i32
    return %c0_i32, %c0_i32_0 : i32, i32
  }
  func.func @transform_6(%arg0: i32) -> (i32, i32) {
    %c0_i32 = arith.constant 0 : i32
    %c0_i32_0 = arith.constant 0 : i32
    %c0_i32_1 = arith.constant 0 : i32
    return %c0_i32, %c0_i32_0 : i32, i32
  }
  func.func @transform_7(%arg0: i32) -> (i32, i32) {
    %c0_i32 = arith.constant 0 : i32
    %c0_i32_0 = arith.constant 0 : i32
    %c0_i32_1 = arith.constant 0 : i32
    return %c0_i32, %c0_i32_0 : i32, i32
  }
  func.func @transform_8(%arg0: i32) -> (i32, i32) {
    %c0_i32 = arith.constant 0 : i32
    %c0_i32_0 = arith.constant 0 : i32
    %c0_i32_1 = arith.constant 0 : i32
    return %c0_i32, %c0_i32_0 : i32, i32
  }
  func.func @transform_9(%arg0: i32) -> (i32, i32) {
    %c0_i32 = arith.constant 0 : i32
    %c0_i32_0 = arith.constant 0 : i32
    return %arg0, %c0_i32 : i32, i32
  }
}

</mosaic_0001>

<llo_original>
// kernel: tpu_custom_call.1
$region0: #{tpu_custom_call.1}
  #allocation0 [shape = 'u32[]', space=smem, size = 0x4, offset = 0x4, fixed_abs, tag = 'smem constant byte address 0x4 - core index']
  #allocation1 [shape = 'u32[144,128]{1,0:T(1,128)}', space=vmem, size = 0x12000, scoped, tag = 'internal scratch']
  %s0 = inlined_call_operand.hbm [shape: f32[32,512], index: 0, kind: input, shape index: {}]
  %s1 = inlined_call_operand.hbm [shape: f32[1,512], index: 1, kind: input, shape index: {}]
  %s2 = inlined_call_operand.hbm [shape: f32[1,512], index: 2, kind: input, shape index: {}]
  %s3 = inlined_call_operand.hbm [shape: f32[9,512], index: 3, kind: input, shape index: {}]
  %s4 = inlined_call_operand.vmem [shape: f32[1,512], index: 4, kind: input, shape index: {}]
  %s5 = inlined_call_operand.hbm [shape: f32[512,512], index: 5, kind: input, shape index: {}]
  %s6 = inlined_call_operand.vmem [shape: f32[1,512], index: 6, kind: input, shape index: {}]
  %s7 = inlined_call_operand.hbm [shape: f32[32,32], index: 7, kind: input, shape index: {}]
  %s8 = inlined_call_operand.vmem [shape: f32[1,32], index: 8, kind: input, shape index: {}]
  %s9 = inlined_call_operand.hbm [shape: f32[32,512], index: 9, kind: output, shape index: {}]
  %s10 = sld [smem:[#allocation0]]
  $region70: #{tpu_custom_call.1} parent=0
    _
  %s12 = ssub.s32 1, %s10
  %s13 = scalar_select 0, %s12, %s10
  $region1: #{tpu_custom_call.1} parent=0
    #allocation2 [shape = 'u8[65536]{0}', space=vmem, size = 0x10000, scoped, tag = 'input window, operand 0, single buffered']
    #allocation3 [shape = 's32[1]{0}', space=sflag, size = 0x4, scoped, tag = 'scoped memory for tpu_custom_call.1']
    #allocation4 [shape = 's32[1]{0}', space=sflag, size = 0x4, scoped, tag = 'scoped memory for tpu_custom_call.1']
    #allocation5 [shape = 'u8[2048]{0}', space=vmem, size = 0x800, scoped, tag = 'input window, operand 1, single buffered']
    #allocation6 [shape = 's32[1]{0}', space=sflag, size = 0x4, scoped, tag = 'scoped memory for tpu_custom_call.1']
    #allocation7 [shape = 'u8[2048]{0}', space=vmem, size = 0x800, scoped, tag = 'input window, operand 2, single buffered']
    #allocation8 [shape = 'u8[32768]{0}', space=vmem, size = 0x8000, scoped, tag = 'input window, operand 3, single buffered']
    #allocation9 [shape = 's32[1]{0}', space=sflag, size = 0x4, scoped, tag = 'scoped memory for tpu_custom_call.1']
    #allocation10 [shape = 'u8[1048576]{0}', space=vmem, size = 0x100000, scoped, tag = 'input window, operand 5, single buffered']
    #allocation11 [shape = 'u8[16384]{0}', space=vmem, size = 0x4000, scoped, tag = 'input window, operand 7, single buffered']
    #allocation12 [shape = 's32[1]{0}', space=sflag, size = 0x4, scoped, tag = 'scoped memory for tpu_custom_call.1']
    #allocation13 [shape = 'u8[65536]{0}', space=vmem, size = 0x10000, scoped, tag = 'output window, operand 0, single buffered']
    %14 = vsyncpa [#allocation3], 0
    %15 = vsyncpa [#allocation6], 0
    %16 = vsyncpa [#allocation9], 0
    %17 = vsyncpa [#allocation12], 0
    %18 = vsyncpa [#allocation4], 0
    // Predicated region
    $region2: #{tpu_custom_call.1} parent=1 // pred_check
      _
    $region3: #{tpu_custom_call.1} parent=1 // pred_check_branch
      %20 = sbr.rel (0) target = $region5
    $region4: #{tpu_custom_call.1} parent=1 // pred_region
      %s22 = ssub.s32 2048, 2048
      %23 = vsyncadd [#allocation3], %s22
      %s24 = sshll.u32 [#allocation2], 4
      %s25 = int_to_ptr.vmem [resolvable:$true] %s24
      %30 = dma.hbm_to_vmem [thread:$0]  %s0, 2048, %s25, [#allocation3], 512, 512, 32
    $region5: #{tpu_custom_call.1} parent=1 // pred_fallthru
      _
    // Predicated region
    $region6: #{tpu_custom_call.1} parent=1 // pred_check
      _
    $region7: #{tpu_custom_call.1} parent=1 // pred_check_branch
      %32 = sbr.rel (0) target = $region9
    $region8: #{tpu_custom_call.1} parent=1 // pred_region
      %s34 = ssub.s32 64, 64
      %35 = vsyncadd [#allocation6], %s34
      %s37 = sshll.u32 [#allocation5], 4
      %s38 = int_to_ptr.vmem [resolvable:$true] %s37
      %40 = dma.hbm_to_vmem [thread:$0]  %s1, 64, %s38, [#allocation6]
    $region9: #{tpu_custom_call.1} parent=1 // pred_fallthru
      _
    // Predicated region
    $region10: #{tpu_custom_call.1} parent=1 // pred_check
      _
    $region11: #{tpu_custom_call.1} parent=1 // pred_check_branch
      %42 = sbr.rel (0) target = $region13
    $region12: #{tpu_custom_call.1} parent=1 // pred_region
      %s44 = ssub.s32 64, 64
      %45 = vsyncadd [#allocation6], %s44
      %s47 = sshll.u32 [#allocation7], 4
      %s48 = int_to_ptr.vmem [resolvable:$true] %s47
      %50 = dma.hbm_to_vmem [thread:$0]  %s2, 64, %s48, [#allocation6]
    $region13: #{tpu_custom_call.1} parent=1 // pred_fallthru
      _
    // Predicated region
    $region14: #{tpu_custom_call.1} parent=1 // pred_check
      _
    $region15: #{tpu_custom_call.1} parent=1 // pred_check_branch
      %52 = sbr.rel (0) target = $region17
    $region16: #{tpu_custom_call.1} parent=1 // pred_region
      %s54 = ssub.s32 1024, 1024
      %55 = vsyncadd [#allocation9], %s54
      %s56 = sshll.u32 [#allocation8], 4
      %s57 = int_to_ptr.vmem [resolvable:$true] %s56
      %62 = dma.hbm_to_vmem [thread:$0]  %s3, 1024, %s57, [#allocation9], 512, 512, 32
    $region17: #{tpu_custom_call.1} parent=1 // pred_fallthru
      _
    // Predicated region
    $region18: #{tpu_custom_call.1} parent=1 // pred_check
      _
    $region19: #{tpu_custom_call.1} parent=1 // pred_check_branch
      %64 = sbr.rel (0) target = $region21
    $region20: #{tpu_custom_call.1} parent=1 // pred_region
      _
    $region21: #{tpu_custom_call.1} parent=1 // pred_fallthru
      _
    // Predicated region
    $region22: #{tpu_custom_call.1} parent=1 // pred_check
      _
    $region23: #{tpu_custom_call.1} parent=1 // pred_check_branch
      %66 = sbr.rel (0) target = $region25
    $region24: #{tpu_custom_call.1} parent=1 // pred_region
      %s68 = ssub.s32 32768, 32768
      %69 = vsyncadd [#allocation9], %s68
      %s70 = sshll.u32 [#allocation10], 4
      %s71 = int_to_ptr.vmem [resolvable:$true] %s70
      %76 = dma.hbm_to_vmem [thread:$0]  %s5, 32768, %s71, [#allocation9], 512, 512, 32
    $region25: #{tpu_custom_call.1} parent=1 // pred_fallthru
      _
    // Predicated region
    $region26: #{tpu_custom_call.1} parent=1 // pred_check
      _
    $region27: #{tpu_custom_call.1} parent=1 // pred_check_branch
      %78 = sbr.rel (0) target = $region29
    $region28: #{tpu_custom_call.1} parent=1 // pred_region
      _
    $region29: #{tpu_custom_call.1} parent=1 // pred_fallthru
      _
    // Predicated region
    $region30: #{tpu_custom_call.1} parent=1 // pred_check
      _
    $region31: #{tpu_custom_call.1} parent=1 // pred_check_branch
      %80 = sbr.rel (0) target = $region33
    $region32: #{tpu_custom_call.1} parent=1 // pred_region
      %s82 = ssub.s32 512, 512
      %83 = vsyncadd [#allocation12], %s82
      %s84 = sshll.u32 [#allocation11], 4
      %s85 = int_to_ptr.vmem [resolvable:$true] %s84
      %90 = dma.hbm_to_vmem [thread:$0]  %s7, 512, %s85, [#allocation12], 128, 128, 8
    $region33: #{tpu_custom_call.1} parent=1 // pred_fallthru
      _
    // Predicated region
    $region34: #{tpu_custom_call.1} parent=1 // pred_check
      _
    $region35: #{tpu_custom_call.1} parent=1 // pred_check_branch
      %92 = sbr.rel (0) target = $region37
    $region36: #{tpu_custom_call.1} parent=1 // pred_region
      _
    $region37: #{tpu_custom_call.1} parent=1 // pred_fallthru
      _
    // Predicated region
    $region38: #{tpu_custom_call.1} parent=1 // pred_check
      _
    $region39: #{tpu_custom_call.1} parent=1 // pred_check_branch
      %94 = sbr.rel (0) target = $region41
    $region40: #{tpu_custom_call.1} parent=1 // pred_region
      %95 = dma.done [#allocation3], 2048
    $region41: #{tpu_custom_call.1} parent=1 // pred_fallthru
      _
    // Predicated region
    $region42: #{tpu_custom_call.1} parent=1 // pred_check
      _
    $region43: #{tpu_custom_call.1} parent=1 // pred_check_branch
      %97 = sbr.rel (0) target = $region45
    $region44: #{tpu_custom_call.1} parent=1 // pred_region
      %98 = dma.done [#allocation6], 64
    $region45: #{tpu_custom_call.1} parent=1 // pred_fallthru
      _
    // Predicated region
    $region46: #{tpu_custom_call.1} parent=1 // pred_check
      _
    $region47: #{tpu_custom_call.1} parent=1 // pred_check_branch
      %100 = sbr.rel (0) target = $region49
    $region48: #{tpu_custom_call.1} parent=1 // pred_region
      %101 = dma.done [#allocation6], 64
    $region49: #{tpu_custom_call.1} parent=1 // pred_fallthru
      _
    // Predicated region
    $region50: #{tpu_custom_call.1} parent=1 // pred_check
      _
    $region51: #{tpu_custom_call.1} parent=1 // pred_check_branch
      %103 = sbr.rel (0) target = $region53
    $region52: #{tpu_custom_call.1} parent=1 // pred_region
      %104 = dma.done [#allocation9], 1024
    $region53: #{tpu_custom_call.1} parent=1 // pred_fallthru
      _
    // Predicated region
    $region54: #{tpu_custom_call.1} parent=1 // pred_check
      _
    $region55: #{tpu_custom_call.1} parent=1 // pred_check_branch
      %106 = sbr.rel (0) target = $region57
    $region56: #{tpu_custom_call.1} parent=1 // pred_region
      %107 = dma.done [#allocation9], 32768
    $region57: #{tpu_custom_call.1} parent=1 // pred_fallthru
      _
    // Predicated region
    $region58: #{tpu_custom_call.1} parent=1 // pred_check
      _
    $region59: #{tpu_custom_call.1} parent=1 // pred_check_branch
      %109 = sbr.rel (0) target = $region61
    $region60: #{tpu_custom_call.1} parent=1 // pred_region
      %110 = dma.done [#allocation12], 512
    $region61: #{tpu_custom_call.1} parent=1 // pred_fallthru
      _
    %v111 = vld [vmem:[#allocation5] sm:$0xf]
    %v112 = vld [vmem:[#allocation7] sm:$0xf]
    %v113 = vld [vmem:[%s4] sm:$0xf]
    %v114 = vld [vmem:[%s6] sm:$0xf]
    %v115 = vld [vmem:[%s8] sm:$0x1]
    %v116 = vld [vmem:[#allocation10] sm:$0xff]
    %v117 = vld [vmem:[#allocation10 + $0x8] sm:$0xff]
    %v118 = vld [vmem:[#allocation10 + $0x10] sm:$0xff]
    %v119 = vld [vmem:[#allocation10 + $0x18] sm:$0xff]
    %v120 = vld [vmem:[#allocation10 + $0x20] sm:$0xff]
    %v121 = vld [vmem:[#allocation10 + $0x28] sm:$0xff]
    %v122 = vld [vmem:[#allocation10 + $0x30] sm:$0xff]
    %v123 = vld [vmem:[#allocation10 + $0x38] sm:$0xff]
    %v124 = vld [vmem:[#allocation10 + $0x40] sm:$0xff]
    %v125 = vld [vmem:[#allocation10 + $0x48] sm:$0xff]
    %v126 = vld [vmem:[#allocation10 + $0x50] sm:$0xff]
    %v127 = vld [vmem:[#allocation10 + $0x58] sm:$0xff]
    %v128 = vld [vmem:[#allocation10 + $0x60] sm:$0xff]
    %v129 = vld [vmem:[#allocation10 + $0x68] sm:$0xff]
    %v130 = vld [vmem:[#allocation10 + $0x70] sm:$0xff]
    %v131 = vld [vmem:[#allocation10 + $0x78] sm:$0xff]
    %v132 = vld [vmem:[#allocation10 + $0x80] sm:$0xff]
    %v133 = vld [vmem:[#allocation10 + $0x88] sm:$0xff]
    %v134 = vld [vmem:[#allocation10 + $0x90] sm:$0xff]
    %v135 = vld [vmem:[#allocation10 + $0x98] sm:$0xff]
    %v136 = vld [vmem:[#allocation10 + $0xa0] sm:$0xff]
    %v137 = vld [vmem:[#allocation10 + $0xa8] sm:$0xff]
    %v138 = vld [vmem:[#allocation10 + $0xb0] sm:$0xff]
    %v139 = vld [vmem:[#allocation10 + $0xb8] sm:$0xff]
    %v140 = vld [vmem:[#allocation10 + $0xc0] sm:$0xff]
    %v141 = vld [vmem:[#allocation10 + $0xc8] sm:$0xff]
    %v142 = vld [vmem:[#allocation10 + $0xd0] sm:$0xff]
    %v143 = vld [vmem:[#allocation10 + $0xd8] sm:$0xff]
    %v144 = vld [vmem:[#allocation10 + $0xe0] sm:$0xff]
    %v145 = vld [vmem:[#allocation10 + $0xe8] sm:$0xff]
    %v146 = vld [vmem:[#allocation10 + $0xf0] sm:$0xff]
    %v147 = vld [vmem:[#allocation10 + $0xf8] sm:$0xff]
    %v148 = vld [vmem:[#allocation10 + $0x100] sm:$0xff]
    %v149 = vld [vmem:[#allocation10 + $0x108] sm:$0xff]
    %v150 = vld [vmem:[#allocation10 + $0x110] sm:$0xff]
    %v151 = vld [vmem:[#allocation10 + $0x118] sm:$0xff]
    %v152 = vld [vmem:[#allocation10 + $0x120] sm:$0xff]
    %v153 = vld [vmem:[#allocation10 + $0x128] sm:$0xff]
    %v154 = vld [vmem:[#allocation10 + $0x130] sm:$0xff]
    %v155 = vld [vmem:[#allocation10 + $0x138] sm:$0xff]
    %v156 = vld [vmem:[#allocation10 + $0x140] sm:$0xff]
    %v157 = vld [vmem:[#allocation10 + $0x148] sm:$0xff]
    %v158 = vld [vmem:[#allocation10 + $0x150] sm:$0xff]
    %v159 = vld [vmem:[#allocation10 + $0x158] sm:$0xff]
    %v160 = vld [vmem:[#allocation10 + $0x160] sm:$0xff]
    %v161 = vld [vmem:[#allocation10 + $0x168] sm:$0xff]
    %v162 = vld [vmem:[#allocation10 + $0x170] sm:$0xff]
    %v163 = vld [vmem:[#allocation10 + $0x178] sm:$0xff]
    %v164 = vld [vmem:[#allocation10 + $0x180] sm:$0xff]
    %v165 = vld [vmem:[#allocation10 + $0x188] sm:$0xff]
    %v166 = vld [vmem:[#allocation10 + $0x190] sm:$0xff]
    %v167 = vld [vmem:[#allocation10 + $0x198] sm:$0xff]
    %v168 = vld [vmem:[#allocation10 + $0x1a0] sm:$0xff]
    %v169 = vld [vmem:[#allocation10 + $0x1a8] sm:$0xff]
    %v170 = vld [vmem:[#allocation10 + $0x1b0] sm:$0xff]
    %v171 = vld [vmem:[#allocation10 + $0x1b8] sm:$0xff]
    %v172 = vld [vmem:[#allocation10 + $0x1c0] sm:$0xff]
    %v173 = vld [vmem:[#allocation10 + $0x1c8] sm:$0xff]
    %v174 = vld [vmem:[#allocation10 + $0x1d0] sm:$0xff]
    %v175 = vld [vmem:[#allocation10 + $0x1d8] sm:$0xff]
    %v176 = vld [vmem:[#allocation10 + $0x1e0] sm:$0xff]
    %v177 = vld [vmem:[#allocation10 + $0x1e8] sm:$0xff]
    %v178 = vld [vmem:[#allocation10 + $0x1f0] sm:$0xff]
    %v179 = vld [vmem:[#allocation10 + $0x1f8] sm:$0xff]
    %v180 = vld [vmem:[#allocation10 + $0x200] sm:$0xff]
    %v181 = vld [vmem:[#allocation10 + $0x208] sm:$0xff]
    %v182 = vld [vmem:[#allocation10 + $0x210] sm:$0xff]
    %v183 = vld [vmem:[#allocation10 + $0x218] sm:$0xff]
    %v184 = vld [vmem:[#allocation10 + $0x220] sm:$0xff]
    %v185 = vld [vmem:[#allocation10 + $0x228] sm:$0xff]
    %v186 = vld [vmem:[#allocation10 + $0x230] sm:$0xff]
    %v187 = vld [vmem:[#allocation10 + $0x238] sm:$0xff]
    %v188 = vld [vmem:[#allocation10 + $0x240] sm:$0xff]
    %v189 = vld [vmem:[#allocation10 + $0x248] sm:$0xff]
    %v190 = vld [vmem:[#allocation10 + $0x250] sm:$0xff]
    %v191 = vld [vmem:[#allocation10 + $0x258] sm:$0xff]
    %v192 = vld [vmem:[#allocation10 + $0x260] sm:$0xff]
    %v193 = vld [vmem:[#allocation10 + $0x268] sm:$0xff]
    %v194 = vld [vmem:[#allocation10 + $0x270] sm:$0xff]
    %v195 = vld [vmem:[#allocation10 + $0x278] sm:$0xff]
    %v196 = vld [vmem:[#allocation10 + $0x280] sm:$0xff]
    %v197 = vld [vmem:[#allocation10 + $0x288] sm:$0xff]
    %v198 = vld [vmem:[#allocation10 + $0x290] sm:$0xff]
    %v199 = vld [vmem:[#allocation10 + $0x298] sm:$0xff]
    %v200 = vld [vmem:[#allocation10 + $0x2a0] sm:$0xff]
    %v201 = vld [vmem:[#allocation10 + $0x2a8] sm:$0xff]
    %v202 = vld [vmem:[#allocation10 + $0x2b0] sm:$0xff]
    %v203 = vld [vmem:[#allocation10 + $0x2b8] sm:$0xff]
    %v204 = vld [vmem:[#allocation10 + $0x2c0] sm:$0xff]
    %v205 = vld [vmem:[#allocation10 + $0x2c8] sm:$0xff]
    %v206 = vld [vmem:[#allocation10 + $0x2d0] sm:$0xff]
    %v207 = vld [vmem:[#allocation10 + $0x2d8] sm:$0xff]
    %v208 = vld [vmem:[#allocation10 + $0x2e0] sm:$0xff]
    %v209 = vld [vmem:[#allocation10 + $0x2e8] sm:$0xff]
    %v210 = vld [vmem:[#allocation10 + $0x2f0] sm:$0xff]
    %v211 = vld [vmem:[#allocation10 + $0x2f8] sm:$0xff]
    %v212 = vld [vmem:[#allocation10 + $0x300] sm:$0xff]
    %v213 = vld [vmem:[#allocation10 + $0x308] sm:$0xff]
    %v214 = vld [vmem:[#allocation10 + $0x310] sm:$0xff]
    %v215 = vld [vmem:[#allocation10 + $0x318] sm:$0xff]
    %v216 = vld [vmem:[#allocation10 + $0x320] sm:$0xff]
    %v217 = vld [vmem:[#allocation10 + $0x328] sm:$0xff]
    %v218 = vld [vmem:[#allocation10 + $0x330] sm:$0xff]
    %v219 = vld [vmem:[#allocation10 + $0x338] sm:$0xff]
    %v220 = vld [vmem:[#allocation10 + $0x340] sm:$0xff]
    %v221 = vld [vmem:[#allocation10 + $0x348] sm:$0xff]
    %v222 = vld [vmem:[#allocation10 + $0x350] sm:$0xff]
    %v223 = vld [vmem:[#allocation10 + $0x358] sm:$0xff]
    %v224 = vld [vmem:[#allocation10 + $0x360] sm:$0xff]
    %v225 = vld [vmem:[#allocation10 + $0x368] sm:$0xff]
    %v226 = vld [vmem:[#allocation10 + $0x370] sm:$0xff]
    %v227 = vld [vmem:[#allocation10 + $0x378] sm:$0xff]
    %v228 = vld [vmem:[#allocation10 + $0x380] sm:$0xff]
    %v229 = vld [vmem:[#allocation10 + $0x388] sm:$0xff]
    %v230 = vld [vmem:[#allocation10 + $0x390] sm:$0xff]
    %v231 = vld [vmem:[#allocation10 + $0x398] sm:$0xff]
    %v232 = vld [vmem:[#allocation10 + $0x3a0] sm:$0xff]
    %v233 = vld [vmem:[#allocation10 + $0x3a8] sm:$0xff]
    %v234 = vld [vmem:[#allocation10 + $0x3b0] sm:$0xff]
    %v235 = vld [vmem:[#allocation10 + $0x3b8] sm:$0xff]
    %v236 = vld [vmem:[#allocation10 + $0x3c0] sm:$0xff]
    %v237 = vld [vmem:[#allocation10 + $0x3c8] sm:$0xff]
    %v238 = vld [vmem:[#allocation10 + $0x3d0] sm:$0xff]
    %v239 = vld [vmem:[#allocation10 + $0x3d8] sm:$0xff]
    %v240 = vld [vmem:[#allocation10 + $0x3e0] sm:$0xff]
    %v241 = vld [vmem:[#allocation10 + $0x3e8] sm:$0xff]
    %v242 = vld [vmem:[#allocation10 + $0x3f0] sm:$0xff]
    %v243 = vld [vmem:[#allocation10 + $0x3f8] sm:$0xff]
    %v244 = vld [vmem:[#allocation10 + $0x400] sm:$0xff]
    %v245 = vld [vmem:[#allocation10 + $0x408] sm:$0xff]
    %v246 = vld [vmem:[#allocation10 + $0x410] sm:$0xff]
    %v247 = vld [vmem:[#allocation10 + $0x418] sm:$0xff]
    %v248 = vld [vmem:[#allocation10 + $0x420] sm:$0xff]
    %v249 = vld [vmem:[#allocation10 + $0x428] sm:$0xff]
    %v250 = vld [vmem:[#allocation10 + $0x430] sm:$0xff]
    %v251 = vld [vmem:[#allocation10 + $0x438] sm:$0xff]
    %v252 = vld [vmem:[#allocation10 + $0x440] sm:$0xff]
    %v253 = vld [vmem:[#allocation10 + $0x448] sm:$0xff]
    %v254 = vld [vmem:[#allocation10 + $0x450] sm:$0xff]
    %v255 = vld [vmem:[#allocation10 + $0x458] sm:$0xff]
    %v256 = vld [vmem:[#allocation10 + $0x460] sm:$0xff]
    %v257 = vld [vmem:[#allocation10 + $0x468] sm:$0xff]
    %v258 = vld [vmem:[#allocation10 + $0x470] sm:$0xff]
    %v259 = vld [vmem:[#allocation10 + $0x478] sm:$0xff]
    %v260 = vld [vmem:[#allocation10 + $0x480] sm:$0xff]
    %v261 = vld [vmem:[#allocation10 + $0x488] sm:$0xff]
    %v262 = vld [vmem:[#allocation10 + $0x490] sm:$0xff]
    %v263 = vld [vmem:[#allocation10 + $0x498] sm:$0xff]
    %v264 = vld [vmem:[#allocation10 + $0x4a0] sm:$0xff]
    %v265 = vld [vmem:[#allocation10 + $0x4a8] sm:$0xff]
    %v266 = vld [vmem:[#allocation10 + $0x4b0] sm:$0xff]
    %v267 = vld [vmem:[#allocation10 + $0x4b8] sm:$0xff]
    %v268 = vld [vmem:[#allocation10 + $0x4c0] sm:$0xff]
    %v269 = vld [vmem:[#allocation10 + $0x4c8] sm:$0xff]
    %v270 = vld [vmem:[#allocation10 + $0x4d0] sm:$0xff]
    %v271 = vld [vmem:[#allocation10 + $0x4d8] sm:$0xff]
    %v272 = vld [vmem:[#allocation10 + $0x4e0] sm:$0xff]
    %v273 = vld [vmem:[#allocation10 + $0x4e8] sm:$0xff]
    %v274 = vld [vmem:[#allocation10 + $0x4f0] sm:$0xff]
    %v275 = vld [vmem:[#allocation10 + $0x4f8] sm:$0xff]
    %v276 = vld [vmem:[#allocation10 + $0x500] sm:$0xff]
    %v277 = vld [vmem:[#allocation10 + $0x508] sm:$0xff]
    %v278 = vld [vmem:[#allocation10 + $0x510] sm:$0xff]
    %v279 = vld [vmem:[#allocation10 + $0x518] sm:$0xff]
    %v280 = vld [vmem:[#allocation10 + $0x520] sm:$0xff]
    %v281 = vld [vmem:[#allocation10 + $0x528] sm:$0xff]
    %v282 = vld [vmem:[#allocation10 + $0x530] sm:$0xff]
    %v283 = vld [vmem:[#allocation10 + $0x538] sm:$0xff]
    %v284 = vld [vmem:[#allocation10 + $0x540] sm:$0xff]
    %v285 = vld [vmem:[#allocation10 + $0x548] sm:$0xff]
    %v286 = vld [vmem:[#allocation10 + $0x550] sm:$0xff]
    %v287 = vld [vmem:[#allocation10 + $0x558] sm:$0xff]
    %v288 = vld [vmem:[#allocation10 + $0x560] sm:$0xff]
    %v289 = vld [vmem:[#allocation10 + $0x568] sm:$0xff]
    %v290 = vld [vmem:[#allocation10 + $0x570] sm:$0xff]
    %v291 = vld [vmem:[#allocation10 + $0x578] sm:$0xff]
    %v292 = vld [vmem:[#allocation10 + $0x580] sm:$0xff]
    %v293 = vld [vmem:[#allocation10 + $0x588] sm:$0xff]
    %v294 = vld [vmem:[#allocation10 + $0x590] sm:$0xff]
    %v295 = vld [vmem:[#allocation10 + $0x598] sm:$0xff]
    %v296 = vld [vmem:[#allocation10 + $0x5a0] sm:$0xff]
    %v297 = vld [vmem:[#allocation10 + $0x5a8] sm:$0xff]
    %v298 = vld [vmem:[#allocation10 + $0x5b0] sm:$0xff]
    %v299 = vld [vmem:[#allocation10 + $0x5b8] sm:$0xff]
    %v300 = vld [vmem:[#allocation10 + $0x5c0] sm:$0xff]
    %v301 = vld [vmem:[#allocation10 + $0x5c8] sm:$0xff]
    %v302 = vld [vmem:[#allocation10 + $0x5d0] sm:$0xff]
    %v303 = vld [vmem:[#allocation10 + $0x5d8] sm:$0xff]
    %v304 = vld [vmem:[#allocation10 + $0x5e0] sm:$0xff]
    %v305 = vld [vmem:[#allocation10 + $0x5e8] sm:$0xff]
    %v306 = vld [vmem:[#allocation10 + $0x5f0] sm:$0xff]
    %v307 = vld [vmem:[#allocation10 + $0x5f8] sm:$0xff]
    %v308 = vld [vmem:[#allocation10 + $0x600] sm:$0xff]
    %v309 = vld [vmem:[#allocation10 + $0x608] sm:$0xff]
    %v310 = vld [vmem:[#allocation10 + $0x610] sm:$0xff]
    %v311 = vld [vmem:[#allocation10 + $0x618] sm:$0xff]
    %v312 = vld [vmem:[#allocation10 + $0x620] sm:$0xff]
    %v313 = vld [vmem:[#allocation10 + $0x628] sm:$0xff]
    %v314 = vld [vmem:[#allocation10 + $0x630] sm:$0xff]
    %v315 = vld [vmem:[#allocation10 + $0x638] sm:$0xff]
    %v316 = vld [vmem:[#allocation10 + $0x640] sm:$0xff]
    %v317 = vld [vmem:[#allocation10 + $0x648] sm:$0xff]
    %v318 = vld [vmem:[#allocation10 + $0x650] sm:$0xff]
    %v319 = vld [vmem:[#allocation10 + $0x658] sm:$0xff]
    %v320 = vld [vmem:[#allocation10 + $0x660] sm:$0xff]
    %v321 = vld [vmem:[#allocation10 + $0x668] sm:$0xff]
    %v322 = vld [vmem:[#allocation10 + $0x670] sm:$0xff]
    %v323 = vld [vmem:[#allocation10 + $0x678] sm:$0xff]
    %v324 = vld [vmem:[#allocation10 + $0x680] sm:$0xff]
    %v325 = vld [vmem:[#allocation10 + $0x688] sm:$0xff]
    %v326 = vld [vmem:[#allocation10 + $0x690] sm:$0xff]
    %v327 = vld [vmem:[#allocation10 + $0x698] sm:$0xff]
    %v328 = vld [vmem:[#allocation10 + $0x6a0] sm:$0xff]
    %v329 = vld [vmem:[#allocation10 + $0x6a8] sm:$0xff]
    %v330 = vld [vmem:[#allocation10 + $0x6b0] sm:$0xff]
    %v331 = vld [vmem:[#allocation10 + $0x6b8] sm:$0xff]
    %v332 = vld [vmem:[#allocation10 + $0x6c0] sm:$0xff]
    %v333 = vld [vmem:[#allocation10 + $0x6c8] sm:$0xff]
    %v334 = vld [vmem:[#allocation10 + $0x6d0] sm:$0xff]
    %v335 = vld [vmem:[#allocation10 + $0x6d8] sm:$0xff]
    %v336 = vld [vmem:[#allocation10 + $0x6e0] sm:$0xff]
    %v337 = vld [vmem:[#allocation10 + $0x6e8] sm:$0xff]
    %v338 = vld [vmem:[#allocation10 + $0x6f0] sm:$0xff]
    %v339 = vld [vmem:[#allocation10 + $0x6f8] sm:$0xff]
    %v340 = vld [vmem:[#allocation10 + $0x700] sm:$0xff]
    %v341 = vld [vmem:[#allocation10 + $0x708] sm:$0xff]
    %v342 = vld [vmem:[#allocation10 + $0x710] sm:$0xff]
    %v343 = vld [vmem:[#allocation10 + $0x718] sm:$0xff]
    %v344 = vld [vmem:[#allocation10 + $0x720] sm:$0xff]
    %v345 = vld [vmem:[#allocation10 + $0x728] sm:$0xff]
    %v346 = vld [vmem:[#allocation10 + $0x730] sm:$0xff]
    %v347 = vld [vmem:[#allocation10 + $0x738] sm:$0xff]
    %v348 = vld [vmem:[#allocation10 + $0x740] sm:$0xff]
    %v349 = vld [vmem:[#allocation10 + $0x748] sm:$0xff]
    %v350 = vld [vmem:[#allocation10 + $0x750] sm:$0xff]
    %v351 = vld [vmem:[#allocation10 + $0x758] sm:$0xff]
    %v352 = vld [vmem:[#allocation10 + $0x760] sm:$0xff]
    %v353 = vld [vmem:[#allocation10 + $0x768] sm:$0xff]
    %v354 = vld [vmem:[#allocation10 + $0x770] sm:$0xff]
    %v355 = vld [vmem:[#allocation10 + $0x778] sm:$0xff]
    %v356 = vld [vmem:[#allocation10 + $0x780] sm:$0xff]
    %v357 = vld [vmem:[#allocation10 + $0x788] sm:$0xff]
    %v358 = vld [vmem:[#allocation10 + $0x790] sm:$0xff]
    %v359 = vld [vmem:[#allocation10 + $0x798] sm:$0xff]
    %v360 = vld [vmem:[#allocation10 + $0x7a0] sm:$0xff]
    %v361 = vld [vmem:[#allocation10 + $0x7a8] sm:$0xff]
    %v362 = vld [vmem:[#allocation10 + $0x7b0] sm:$0xff]
    %v363 = vld [vmem:[#allocation10 + $0x7b8] sm:$0xff]
    %v364 = vld [vmem:[#allocation10 + $0x7c0] sm:$0xff]
    %v365 = vld [vmem:[#allocation10 + $0x7c8] sm:$0xff]
    %v366 = vld [vmem:[#allocation10 + $0x7d0] sm:$0xff]
    %v367 = vld [vmem:[#allocation10 + $0x7d8] sm:$0xff]
    %v368 = vld [vmem:[#allocation10 + $0x7e0] sm:$0xff]
    %v369 = vld [vmem:[#allocation10 + $0x7e8] sm:$0xff]
    %v370 = vld [vmem:[#allocation10 + $0x7f0] sm:$0xff]
    %v371 = vld [vmem:[#allocation10 + $0x7f8] sm:$0xff]
    %v372 = vld [vmem:[#allocation11] sm:$0xff]
    %v373 = vld [vmem:[#allocation11 + $0x8] sm:$0xff]
    %v374 = vld [vmem:[#allocation11 + $0x10] sm:$0xff]
    %v375 = vld [vmem:[#allocation11 + $0x18] sm:$0xff]
    %v376 = vld [vmem:[#allocation8] ss:$8 sm:$0xf]
    %s377 = scalar_lea.vmem [#allocation8], 1
    %v378 = vld [vmem:[%s377] ss:$8 sm:$0xf]
    %s379 = scalar_lea.vmem [#allocation8], 2
    %v380 = vld [vmem:[%s379] ss:$8 sm:$0xf]
    %s381 = scalar_lea.vmem [#allocation8], 3
    %v382 = vld [vmem:[%s381] ss:$8 sm:$0xf]
    %s383 = scalar_lea.vmem [#allocation8], 4
    %v384 = vld [vmem:[%s383] ss:$8 sm:$0xf]
    %s385 = scalar_lea.vmem [#allocation8], 5
    %v386 = vld [vmem:[%s385] ss:$8 sm:$0xf]
    %s387 = scalar_lea.vmem [#allocation8], 6
    %v388 = vld [vmem:[%s387] ss:$8 sm:$0xf]
    %s389 = scalar_lea.vmem [#allocation8], 7
    %v390 = vld [vmem:[%s389] ss:$8 sm:$0xf]
    %s391 = scalar_lea.vmem [#allocation8], 32
    %v392 = vld [vmem:[%s391] ss:$8 sm:$0xf]
    %v393 = vld [vmem:[#allocation2] sm:$0xff]
    %v394 = vld [vmem:[#allocation2 + $0x8] sm:$0xff]
    %v395 = vld [vmem:[#allocation2 + $0x10] sm:$0xff]
    %v396 = vld [vmem:[#allocation2 + $0x18] sm:$0xff]
    %v397 = vld [vmem:[#allocation2 + $0x20] sm:$0xff]
    %v398 = vld [vmem:[#allocation2 + $0x28] sm:$0xff]
    %v399 = vld [vmem:[#allocation2 + $0x30] sm:$0xff]
    %v400 = vld [vmem:[#allocation2 + $0x38] sm:$0xff]
    %v401 = vadd.f32 %v393, %v394
    %v402 = vadd.f32 %v401, %v395
    %v403 = vadd.f32 %v402, %v396
    %v404 = vadd.f32 %v403, %v397
    %v405 = vadd.f32 %v404, %v398
    %v406 = vadd.f32 %v405, %v399
    %v407 = vadd.f32 %v406, %v400
    %408 = vadd.xlane.f32.xlu0 %v407
    %v409 = vpop.xlane.xlu0 %408
    %v410 = vrot.slane %v409, 4
    %v411 = vadd.f32 %v409, %v410
    %v412 = vrot.slane %v411, 2
    %v413 = vadd.f32 %v411, %v412
    %v414 = vrot.slane %v413, 1
    %v415 = vadd.f32 %v413, %v414
    %s416 = vtos %v415
    %v417 = vmul.f32 %v393, %v393
    %v418 = vmul.f32 %v394, %v394
    %v419 = vmul.f32 %v395, %v395
    %v420 = vmul.f32 %v396, %v396
    %v421 = vmul.f32 %v397, %v397
    %v422 = vmul.f32 %v398, %v398
    %v423 = vmul.f32 %v399, %v399
    %v424 = vmul.f32 %v400, %v400
    %v425 = vadd.f32 %v417, %v418
    %v426 = vadd.f32 %v425, %v419
    %v427 = vadd.f32 %v426, %v420
    %v428 = vadd.f32 %v427, %v421
    %v429 = vadd.f32 %v428, %v422
    %v430 = vadd.f32 %v429, %v423
    %v431 = vadd.f32 %v430, %v424
    %432 = vadd.xlane.f32.xlu0 %v431
    %v433 = vpop.xlane.xlu0 %432
    %v434 = vrot.slane %v433, 4
    %v435 = vadd.f32 %v433, %v434
    %v436 = vrot.slane %v435, 2
    %v437 = vadd.f32 %v435, %v436
    %v438 = vrot.slane %v437, 1
    %v439 = vadd.f32 %v437, %v438
    %s440 = vtos %v439
    %s441 = smul.f32 %s416, 0.00012207031
    %s442 = smul.f32 %s440, 0.00012207031
    %s443 = smul.f32 %s441, %s441
    %s444 = ssub.f32 %s442, %s443
    %v445 = vstv %s441
    %v446 = vsub.f32 %v393, %v445
    %v447 = vsub.f32 %v394, %v445
    %v448 = vsub.f32 %v395, %v445
    %v449 = vsub.f32 %v396, %v445
    %v450 = vsub.f32 %v397, %v445
    %v451 = vsub.f32 %v398, %v445
    %v452 = vsub.f32 %v399, %v445
    %v453 = vsub.f32 %v400, %v445
    %s454 = sadd.f32 %s444, 1e-05
    %v455 = vstv %s454
    %v456 = vrsqrt.pop %v455
    %s457 = vtos %v456
    %v458 = vstv %s457
    %v459 = vmul.f32 %v446, %v458
    %v460 = vmul.f32 %v447, %v458
    %v461 = vmul.f32 %v448, %v458
    %v462 = vmul.f32 %v449, %v458
    %v463 = vmul.f32 %v450, %v458
    %v464 = vmul.f32 %v451, %v458
    %v465 = vmul.f32 %v452, %v458
    %v466 = vmul.f32 %v453, %v458
    %v468 = vlaneseq
    %v469 = vshrl.u32 %v468, 7
    %v470 = vsub.s32 0, %v469
    %v471 = vrot.slane %v111, %v470
    %v472 = vlaneseq
    %v473 = vshrl.u32 %v472, 7
    %v474 = vsub.s32 1, %v473
    %v475 = vrot.slane %v111, %v474
    %v476 = vlaneseq
    %v477 = vshrl.u32 %v476, 7
    %v478 = vsub.s32 2, %v477
    %v479 = vrot.slane %v111, %v478
    %v480 = vlaneseq
    %v481 = vshrl.u32 %v480, 7
    %v482 = vsub.s32 3, %v481
    %v483 = vrot.slane %v111, %v482
    %v488 = vmul.f32 %v459, %v471
    %v489 = vmul.f32 %v460, %v475
    %v490 = vmul.f32 %v461, %v479
    %v491 = vmul.f32 %v462, %v483
    %v492 = vmul.f32 %v463, %v471
    %v493 = vmul.f32 %v464, %v475
    %v494 = vmul.f32 %v465, %v479
    %v495 = vmul.f32 %v466, %v483
    %v497 = vlaneseq
    %v498 = vshrl.u32 %v497, 7
    %v499 = vsub.s32 0, %v498
    %v500 = vrot.slane %v112, %v499
    %v501 = vlaneseq
    %v502 = vshrl.u32 %v501, 7
    %v503 = vsub.s32 1, %v502
    %v504 = vrot.slane %v112, %v503
    %v505 = vlaneseq
    %v506 = vshrl.u32 %v505, 7
    %v507 = vsub.s32 2, %v506
    %v508 = vrot.slane %v112, %v507
    %v509 = vlaneseq
    %v510 = vshrl.u32 %v509, 7
    %v511 = vsub.s32 3, %v510
    %v512 = vrot.slane %v112, %v511
    %v517 = vadd.f32 %v488, %v500
    %v518 = vadd.f32 %v489, %v504
    %v519 = vadd.f32 %v490, %v508
    %v520 = vadd.f32 %v491, %v512
    %v521 = vadd.f32 %v492, %v500
    %v522 = vadd.f32 %v493, %v504
    %v523 = vadd.f32 %v494, %v508
    %v524 = vadd.f32 %v495, %v512
    %vm533 = vcmask 1040384
    %v534 = vrot.slane %v517, 7
    %v535 = vrot.slane %v518, 7
    %v536 = vrot.slane %v519, 7
    %v537 = vrot.slane %v520, 7
    %v538 = vrot.slane %v521, 7
    %v539 = vsel %vm533, %v534, %v538
    %v540 = vrot.slane %v522, 7
    %v541 = vsel %vm533, %v535, %v540
    %v542 = vrot.slane %v523, 7
    %v543 = vsel %vm533, %v536, %v542
    %v544 = vrot.slane %v524, 7
    %v545 = vsel %vm533, %v537, %v544
    %v554 = vsel %vm533, 0.0, %v534
    %v555 = vsel %vm533, 0.0, %v535
    %v556 = vsel %vm533, 0.0, %v536
    %v557 = vsel %vm533, 0.0, %v537
    %562 = vrot.lane.b32.xlu0 %v554, 32
    %v563 = vpop.permute.xlu0 %562
    %564 = vrot.lane.b32.xlu0 %v555, 32
    %v565 = vpop.permute.xlu0 %564
    %566 = vrot.lane.b32.xlu0 %v556, 32
    %v567 = vpop.permute.xlu0 %566
    %568 = vrot.lane.b32.xlu0 %v557, 32
    %v569 = vpop.permute.xlu0 %568
    %570 = vrot.lane.b32.xlu0 %v539, 32
    %v571 = vpop.permute.xlu0 %570
    %572 = vrot.lane.b32.xlu0 %v541, 32
    %v573 = vpop.permute.xlu0 %572
    %574 = vrot.lane.b32.xlu0 %v543, 32
    %v575 = vpop.permute.xlu0 %574
    %576 = vrot.lane.b32.xlu0 %v545, 32
    %v577 = vpop.permute.xlu0 %576
    %vm578 = vcmask 261120
    %v579 = vsel %vm578, %v563, %v565
    %v580 = vsel %vm578, %v565, %v567
    %v581 = vsel %vm578, %v567, %v569
    %v582 = vsel %vm578, %v571, %v573
    %v583 = vsel %vm578, %v573, %v575
    %v584 = vsel %vm578, %v575, %v577
    %v593 = vsel %vm578, 0.0, %v563
    %v594 = vsel %vm578, 0.0, %v571
    %v596 = vlaneseq
    %v597 = vshrl.u32 %v596, 7
    %v598 = vsub.s32 0, %v597
    %v599 = vrot.slane %v376, %v598
    %v600 = vlaneseq
    %v601 = vshrl.u32 %v600, 7
    %v602 = vsub.s32 1, %v601
    %v603 = vrot.slane %v376, %v602
    %v604 = vlaneseq
    %v605 = vshrl.u32 %v604, 7
    %v606 = vsub.s32 2, %v605
    %v607 = vrot.slane %v376, %v606
    %v608 = vlaneseq
    %v609 = vshrl.u32 %v608, 7
    %v610 = vsub.s32 3, %v609
    %v611 = vrot.slane %v376, %v610
    %v616 = vmul.f32 %v593, %v599
    %v617 = vmul.f32 %v579, %v603
    %v618 = vmul.f32 %v580, %v607
    %v619 = vmul.f32 %v581, %v611
    %v620 = vmul.f32 %v594, %v599
    %v621 = vmul.f32 %v582, %v603
    %v622 = vmul.f32 %v583, %v607
    %v623 = vmul.f32 %v584, %v611
    %v624 = vadd.f32 %v616, 0.0
    %v625 = vadd.f32 %v617, 0.0
    %v626 = vadd.f32 %v618, 0.0
    %v627 = vadd.f32 %v619, 0.0
    %v628 = vadd.f32 %v620, 0.0
    %v629 = vadd.f32 %v621, 0.0
    %v630 = vadd.f32 %v622, 0.0
    %v631 = vadd.f32 %v623, 0.0
    %v633 = vlaneseq
    %v634 = vshrl.u32 %v633, 7
    %v635 = vsub.s32 0, %v634
    %v636 = vrot.slane %v378, %v635
    %v637 = vlaneseq
    %v638 = vshrl.u32 %v637, 7
    %v639 = vsub.s32 1, %v638
    %v640 = vrot.slane %v378, %v639
    %v641 = vlaneseq
    %v642 = vshrl.u32 %v641, 7
    %v643 = vsub.s32 2, %v642
    %v644 = vrot.slane %v378, %v643
    %v645 = vlaneseq
    %v646 = vshrl.u32 %v645, 7
    %v647 = vsub.s32 3, %v646
    %v648 = vrot.slane %v378, %v647
    %v653 = vmul.f32 %v554, %v636
    %v654 = vmul.f32 %v555, %v640
    %v655 = vmul.f32 %v556, %v644
    %v656 = vmul.f32 %v557, %v648
    %v657 = vmul.f32 %v539, %v636
    %v658 = vmul.f32 %v541, %v640
    %v659 = vmul.f32 %v543, %v644
    %v660 = vmul.f32 %v545, %v648
    %v661 = vadd.f32 %v624, %v653
    %v662 = vadd.f32 %v625, %v654
    %v663 = vadd.f32 %v626, %v655
    %v664 = vadd.f32 %v627, %v656
    %v665 = vadd.f32 %v628, %v657
    %v666 = vadd.f32 %v629, %v658
    %v667 = vadd.f32 %v630, %v659
    %v668 = vadd.f32 %v631, %v660
    %669 = vrot.lane.b32.xlu0 %v554, 96
    %v670 = vpop.permute.xlu0 %669
    %671 = vrot.lane.b32.xlu0 %v555, 96
    %v672 = vpop.permute.xlu0 %671
    %673 = vrot.lane.b32.xlu0 %v556, 96
    %v674 = vpop.permute.xlu0 %673
    %675 = vrot.lane.b32.xlu0 %v557, 96
    %v676 = vpop.permute.xlu0 %675
    %677 = vrot.lane.b32.xlu0 %v539, 96
    %v678 = vpop.permute.xlu0 %677
    %679 = vrot.lane.b32.xlu0 %v541, 96
    %v680 = vpop.permute.xlu0 %679
    %681 = vrot.lane.b32.xlu0 %v543, 96
    %v682 = vpop.permute.xlu0 %681
    %683 = vrot.lane.b32.xlu0 %v545, 96
    %v684 = vpop.permute.xlu0 %683
    %vm685 = vcmask 785408
    %v686 = vsel %vm685, %v670, %v672
    %v687 = vsel %vm685, %v672, %v674
    %v688 = vsel %vm685, %v674, %v676
    %v689 = vsel %vm685, %v678, %v680
    %v690 = vsel %vm685, %v680, %v682
    %v691 = vsel %vm685, %v682, %v684
    %v700 = vsel %vm685, %v676, 0.0
    %v701 = vsel %vm685, %v684, 0.0
    %v703 = vlaneseq
    %v704 = vshrl.u32 %v703, 7
    %v705 = vsub.s32 0, %v704
    %v706 = vrot.slane %v380, %v705
    %v707 = vlaneseq
    %v708 = vshrl.u32 %v707, 7
    %v709 = vsub.s32 1, %v708
    %v710 = vrot.slane %v380, %v709
    %v711 = vlaneseq
    %v712 = vshrl.u32 %v711, 7
    %v713 = vsub.s32 2, %v712
    %v714 = vrot.slane %v380, %v713
    %v715 = vlaneseq
    %v716 = vshrl.u32 %v715, 7
    %v717 = vsub.s32 3, %v716
    %v718 = vrot.slane %v380, %v717
    %v723 = vmul.f32 %v686, %v706
    %v724 = vmul.f32 %v687, %v710
    %v725 = vmul.f32 %v688, %v714
    %v726 = vmul.f32 %v700, %v718
    %v727 = vmul.f32 %v689, %v706
    %v728 = vmul.f32 %v690, %v710
    %v729 = vmul.f32 %v691, %v714
    %v730 = vmul.f32 %v701, %v718
    %v731 = vadd.f32 %v661, %v723
    %v732 = vadd.f32 %v662, %v724
    %v733 = vadd.f32 %v663, %v725
    %v734 = vadd.f32 %v664, %v726
    %v735 = vadd.f32 %v665, %v727
    %v736 = vadd.f32 %v666, %v728
    %v737 = vadd.f32 %v667, %v729
    %v738 = vadd.f32 %v668, %v730
    %739 = vrot.lane.b32.xlu0 %v517, 32
    %v740 = vpop.permute.xlu0 %739
    %741 = vrot.lane.b32.xlu0 %v518, 32
    %v742 = vpop.permute.xlu0 %741
    %743 = vrot.lane.b32.xlu0 %v519, 32
    %v744 = vpop.permute.xlu0 %743
    %745 = vrot.lane.b32.xlu0 %v520, 32
    %v746 = vpop.permute.xlu0 %745
    %747 = vrot.lane.b32.xlu0 %v521, 32
    %v748 = vpop.permute.xlu0 %747
    %749 = vrot.lane.b32.xlu0 %v522, 32
    %v750 = vpop.permute.xlu0 %749
    %751 = vrot.lane.b32.xlu0 %v523, 32
    %v752 = vpop.permute.xlu0 %751
    %753 = vrot.lane.b32.xlu0 %v524, 32
    %v754 = vpop.permute.xlu0 %753
    %v755 = vsel %vm578, %v740, %v742
    %v756 = vsel %vm578, %v742, %v744
    %v757 = vsel %vm578, %v744, %v746
    %v758 = vsel %vm578, %v748, %v750
    %v759 = vsel %vm578, %v750, %v752
    %v760 = vsel %vm578, %v752, %v754
    %v769 = vsel %vm578, 0.0, %v740
    %v770 = vsel %vm578, 0.0, %v748
    %v772 = vlaneseq
    %v773 = vshrl.u32 %v772, 7
    %v774 = vsub.s32 0, %v773
    %v775 = vrot.slane %v382, %v774
    %v776 = vlaneseq
    %v777 = vshrl.u32 %v776, 7
    %v778 = vsub.s32 1, %v777
    %v779 = vrot.slane %v382, %v778
    %v780 = vlaneseq
    %v781 = vshrl.u32 %v780, 7
    %v782 = vsub.s32 2, %v781
    %v783 = vrot.slane %v382, %v782
    %v784 = vlaneseq
    %v785 = vshrl.u32 %v784, 7
    %v786 = vsub.s32 3, %v785
    %v787 = vrot.slane %v382, %v786
    %v792 = vmul.f32 %v769, %v775
    %v793 = vmul.f32 %v755, %v779
    %v794 = vmul.f32 %v756, %v783
    %v795 = vmul.f32 %v757, %v787
    %v796 = vmul.f32 %v770, %v775
    %v797 = vmul.f32 %v758, %v779
    %v798 = vmul.f32 %v759, %v783
    %v799 = vmul.f32 %v760, %v787
    %v800 = vadd.f32 %v731, %v792
    %v801 = vadd.f32 %v732, %v793
    %v802 = vadd.f32 %v733, %v794
    %v803 = vadd.f32 %v734, %v795
    %v804 = vadd.f32 %v735, %v796
    %v805 = vadd.f32 %v736, %v797
    %v806 = vadd.f32 %v737, %v798
    %v807 = vadd.f32 %v738, %v799
    %v809 = vlaneseq
    %v810 = vshrl.u32 %v809, 7
    %v811 = vsub.s32 0, %v810
    %v812 = vrot.slane %v384, %v811
    %v813 = vlaneseq
    %v814 = vshrl.u32 %v813, 7
    %v815 = vsub.s32 1, %v814
    %v816 = vrot.slane %v384, %v815
    %v817 = vlaneseq
    %v818 = vshrl.u32 %v817, 7
    %v819 = vsub.s32 2, %v818
    %v820 = vrot.slane %v384, %v819
    %v821 = vlaneseq
    %v822 = vshrl.u32 %v821, 7
    %v823 = vsub.s32 3, %v822
    %v824 = vrot.slane %v384, %v823
    %v829 = vmul.f32 %v517, %v812
    %v830 = vmul.f32 %v518, %v816
    %v831 = vmul.f32 %v519, %v820
    %v832 = vmul.f32 %v520, %v824
    %v833 = vmul.f32 %v521, %v812
    %v834 = vmul.f32 %v522, %v816
    %v835 = vmul.f32 %v523, %v820
    %v836 = vmul.f32 %v524, %v824
    %v837 = vadd.f32 %v800, %v829
    %v838 = vadd.f32 %v801, %v830
    %v839 = vadd.f32 %v802, %v831
    %v840 = vadd.f32 %v803, %v832
    %v841 = vadd.f32 %v804, %v833
    %v842 = vadd.f32 %v805, %v834
    %v843 = vadd.f32 %v806, %v835
    %v844 = vadd.f32 %v807, %v836
    %845 = vrot.lane.b32.xlu0 %v517, 96
    %v846 = vpop.permute.xlu0 %845
    %847 = vrot.lane.b32.xlu0 %v518, 96
    %v848 = vpop.permute.xlu0 %847
    %849 = vrot.lane.b32.xlu0 %v519, 96
    %v850 = vpop.permute.xlu0 %849
    %851 = vrot.lane.b32.xlu0 %v520, 96
    %v852 = vpop.permute.xlu0 %851
    %853 = vrot.lane.b32.xlu0 %v521, 96
    %v854 = vpop.permute.xlu0 %853
    %855 = vrot.lane.b32.xlu0 %v522, 96
    %v856 = vpop.permute.xlu0 %855
    %857 = vrot.lane.b32.xlu0 %v523, 96
    %v858 = vpop.permute.xlu0 %857
    %859 = vrot.lane.b32.xlu0 %v524, 96
    %v860 = vpop.permute.xlu0 %859
    %v861 = vsel %vm685, %v846, %v848
    %v862 = vsel %vm685, %v848, %v850
    %v863 = vsel %vm685, %v850, %v852
    %v864 = vsel %vm685, %v854, %v856
    %v865 = vsel %vm685, %v856, %v858
    %v866 = vsel %vm685, %v858, %v860
    %v875 = vsel %vm685, %v852, 0.0
    %v876 = vsel %vm685, %v860, 0.0
    %v878 = vlaneseq
    %v879 = vshrl.u32 %v878, 7
    %v880 = vsub.s32 0, %v879
    %v881 = vrot.slane %v386, %v880
    %v882 = vlaneseq
    %v883 = vshrl.u32 %v882, 7
    %v884 = vsub.s32 1, %v883
    %v885 = vrot.slane %v386, %v884
    %v886 = vlaneseq
    %v887 = vshrl.u32 %v886, 7
    %v888 = vsub.s32 2, %v887
    %v889 = vrot.slane %v386, %v888
    %v890 = vlaneseq
    %v891 = vshrl.u32 %v890, 7
    %v892 = vsub.s32 3, %v891
    %v893 = vrot.slane %v386, %v892
    %v898 = vmul.f32 %v861, %v881
    %v899 = vmul.f32 %v862, %v885
    %v900 = vmul.f32 %v863, %v889
    %v901 = vmul.f32 %v875, %v893
    %v902 = vmul.f32 %v864, %v881
    %v903 = vmul.f32 %v865, %v885
    %v904 = vmul.f32 %v866, %v889
    %v905 = vmul.f32 %v876, %v893
    %v906 = vadd.f32 %v837, %v898
    %v907 = vadd.f32 %v838, %v899
    %v908 = vadd.f32 %v839, %v900
    %v909 = vadd.f32 %v840, %v901
    %v910 = vadd.f32 %v841, %v902
    %v911 = vadd.f32 %v842, %v903
    %v912 = vadd.f32 %v843, %v904
    %v913 = vadd.f32 %v844, %v905
    %vm914 = vcmask 1046528
    %v915 = vrot.slane %v517, 1
    %v916 = vrot.slane %v521, 1
    %v917 = vsel %vm914, %v915, %v916
    %v918 = vrot.slane %v518, 1
    %v919 = vrot.slane %v522, 1
    %v920 = vsel %vm914, %v918, %v919
    %v921 = vrot.slane %v519, 1
    %v922 = vrot.slane %v523, 1
    %v923 = vsel %vm914, %v921, %v922
    %v924 = vrot.slane %v520, 1
    %v925 = vrot.slane %v524, 1
    %v926 = vsel %vm914, %v924, %v925
    %v935 = vsel %vm914, %v916, 0.0
    %v936 = vsel %vm914, %v919, 0.0
    %v937 = vsel %vm914, %v922, 0.0
    %v938 = vsel %vm914, %v925, 0.0
    %943 = vrot.lane.b32.xlu0 %v917, 32
    %v944 = vpop.permute.xlu0 %943
    %945 = vrot.lane.b32.xlu0 %v920, 32
    %v946 = vpop.permute.xlu0 %945
    %947 = vrot.lane.b32.xlu0 %v923, 32
    %v948 = vpop.permute.xlu0 %947
    %949 = vrot.lane.b32.xlu0 %v926, 32
    %v950 = vpop.permute.xlu0 %949
    %951 = vrot.lane.b32.xlu0 %v935, 32
    %v952 = vpop.permute.xlu0 %951
    %953 = vrot.lane.b32.xlu0 %v936, 32
    %v954 = vpop.permute.xlu0 %953
    %955 = vrot.lane.b32.xlu0 %v937, 32
    %v956 = vpop.permute.xlu0 %955
    %957 = vrot.lane.b32.xlu0 %v938, 32
    %v958 = vpop.permute.xlu0 %957
    %v959 = vsel %vm578, %v944, %v946
    %v960 = vsel %vm578, %v946, %v948
    %v961 = vsel %vm578, %v948, %v950
    %v962 = vsel %vm578, %v952, %v954
    %v963 = vsel %vm578, %v954, %v956
    %v964 = vsel %vm578, %v956, %v958
    %v973 = vsel %vm578, 0.0, %v944
    %v974 = vsel %vm578, 0.0, %v952
    %v976 = vlaneseq
    %v977 = vshrl.u32 %v976, 7
    %v978 = vsub.s32 0, %v977
    %v979 = vrot.slane %v388, %v978
    %v980 = vlaneseq
    %v981 = vshrl.u32 %v980, 7
    %v982 = vsub.s32 1, %v981
    %v983 = vrot.slane %v388, %v982
    %v984 = vlaneseq
    %v985 = vshrl.u32 %v984, 7
    %v986 = vsub.s32 2, %v985
    %v987 = vrot.slane %v388, %v986
    %v988 = vlaneseq
    %v989 = vshrl.u32 %v988, 7
    %v990 = vsub.s32 3, %v989
    %v991 = vrot.slane %v388, %v990
    %v996 = vmul.f32 %v973, %v979
    %v997 = vmul.f32 %v959, %v983
    %v998 = vmul.f32 %v960, %v987
    %v999 = vmul.f32 %v961, %v991
    %v1000 = vmul.f32 %v974, %v979
    %v1001 = vmul.f32 %v962, %v983
    %v1002 = vmul.f32 %v963, %v987
    %v1003 = vmul.f32 %v964, %v991
    %v1004 = vadd.f32 %v906, %v996
    %v1005 = vadd.f32 %v907, %v997
    %v1006 = vadd.f32 %v908, %v998
    %v1007 = vadd.f32 %v909, %v999
    %v1008 = vadd.f32 %v910, %v1000
    %v1009 = vadd.f32 %v911, %v1001
    %v1010 = vadd.f32 %v912, %v1002
    %v1011 = vadd.f32 %v913, %v1003
    %v1013 = vlaneseq
    %v1014 = vshrl.u32 %v1013, 7
    %v1015 = vsub.s32 0, %v1014
    %v1016 = vrot.slane %v390, %v1015
    %v1017 = vlaneseq
    %v1018 = vshrl.u32 %v1017, 7
    %v1019 = vsub.s32 1, %v1018
    %v1020 = vrot.slane %v390, %v1019
    %v1021 = vlaneseq
    %v1022 = vshrl.u32 %v1021, 7
    %v1023 = vsub.s32 2, %v1022
    %v1024 = vrot.slane %v390, %v1023
    %v1025 = vlaneseq
    %v1026 = vshrl.u32 %v1025, 7
    %v1027 = vsub.s32 3, %v1026
    %v1028 = vrot.slane %v390, %v1027
    %v1033 = vmul.f32 %v917, %v1016
    %v1034 = vmul.f32 %v920, %v1020
    %v1035 = vmul.f32 %v923, %v1024
    %v1036 = vmul.f32 %v926, %v1028
    %v1037 = vmul.f32 %v935, %v1016
    %v1038 = vmul.f32 %v936, %v1020
    %v1039 = vmul.f32 %v937, %v1024
    %v1040 = vmul.f32 %v938, %v1028
    %v1041 = vadd.f32 %v1004, %v1033
    %v1042 = vadd.f32 %v1005, %v1034
    %v1043 = vadd.f32 %v1006, %v1035
    %v1044 = vadd.f32 %v1007, %v1036
    %v1045 = vadd.f32 %v1008, %v1037
    %v1046 = vadd.f32 %v1009, %v1038
    %v1047 = vadd.f32 %v1010, %v1039
    %v1048 = vadd.f32 %v1011, %v1040
    %1049 = vrot.lane.b32.xlu0 %v917, 96
    %v1050 = vpop.permute.xlu0 %1049
    %1051 = vrot.lane.b32.xlu0 %v920, 96
    %v1052 = vpop.permute.xlu0 %1051
    %1053 = vrot.lane.b32.xlu0 %v923, 96
    %v1054 = vpop.permute.xlu0 %1053
    %1055 = vrot.lane.b32.xlu0 %v926, 96
    %v1056 = vpop.permute.xlu0 %1055
    %1057 = vrot.lane.b32.xlu0 %v935, 96
    %v1058 = vpop.permute.xlu0 %1057
    %1059 = vrot.lane.b32.xlu0 %v936, 96
    %v1060 = vpop.permute.xlu0 %1059
    %1061 = vrot.lane.b32.xlu0 %v937, 96
    %v1062 = vpop.permute.xlu0 %1061
    %1063 = vrot.lane.b32.xlu0 %v938, 96
    %v1064 = vpop.permute.xlu0 %1063
    %v1065 = vsel %vm685, %v1050, %v1052
    %v1066 = vsel %vm685, %v1052, %v1054
    %v1067 = vsel %vm685, %v1054, %v1056
    %v1068 = vsel %vm685, %v1058, %v1060
    %v1069 = vsel %vm685, %v1060, %v1062
    %v1070 = vsel %vm685, %v1062, %v1064
    %v1079 = vsel %vm685, %v1056, 0.0
    %v1080 = vsel %vm685, %v1064, 0.0
    %v1082 = vlaneseq
    %v1083 = vshrl.u32 %v1082, 7
    %v1084 = vsub.s32 0, %v1083
    %v1085 = vrot.slane %v392, %v1084
    %v1086 = vlaneseq
    %v1087 = vshrl.u32 %v1086, 7
    %v1088 = vsub.s32 1, %v1087
    %v1089 = vrot.slane %v392, %v1088
    %v1090 = vlaneseq
    %v1091 = vshrl.u32 %v1090, 7
    %v1092 = vsub.s32 2, %v1091
    %v1093 = vrot.slane %v392, %v1092
    %v1094 = vlaneseq
    %v1095 = vshrl.u32 %v1094, 7
    %v1096 = vsub.s32 3, %v1095
    %v1097 = vrot.slane %v392, %v1096
    %v1102 = vmul.f32 %v1065, %v1085
    %v1103 = vmul.f32 %v1066, %v1089
    %v1104 = vmul.f32 %v1067, %v1093
    %v1105 = vmul.f32 %v1079, %v1097
    %v1106 = vmul.f32 %v1068, %v1085
    %v1107 = vmul.f32 %v1069, %v1089
    %v1108 = vmul.f32 %v1070, %v1093
    %v1109 = vmul.f32 %v1080, %v1097
    %v1110 = vadd.f32 %v1041, %v1102
    %v1111 = vadd.f32 %v1042, %v1103
    %v1112 = vadd.f32 %v1043, %v1104
    %v1113 = vadd.f32 %v1044, %v1105
    %v1114 = vadd.f32 %v1045, %v1106
    %v1115 = vadd.f32 %v1046, %v1107
    %v1116 = vadd.f32 %v1047, %v1108
    %v1117 = vadd.f32 %v1048, %v1109
    %v1119 = vlaneseq
    %v1120 = vshrl.u32 %v1119, 7
    %v1121 = vsub.s32 0, %v1120
    %v1122 = vrot.slane %v113, %v1121
    %v1123 = vlaneseq
    %v1124 = vshrl.u32 %v1123, 7
    %v1125 = vsub.s32 1, %v1124
    %v1126 = vrot.slane %v113, %v1125
    %v1127 = vlaneseq
    %v1128 = vshrl.u32 %v1127, 7
    %v1129 = vsub.s32 2, %v1128
    %v1130 = vrot.slane %v113, %v1129
    %v1131 = vlaneseq
    %v1132 = vshrl.u32 %v1131, 7
    %v1133 = vsub.s32 3, %v1132
    %v1134 = vrot.slane %v113, %v1133
    %v1139 = vadd.f32 %v1110, %v1122
    %v1140 = vadd.f32 %v1111, %v1126
    %v1141 = vadd.f32 %v1112, %v1130
    %v1142 = vadd.f32 %v1113, %v1134
    %v1143 = vadd.f32 %v1114, %v1122
    %v1144 = vadd.f32 %v1115, %v1126
    %v1145 = vadd.f32 %v1116, %v1130
    %v1146 = vadd.f32 %v1117, %v1134
    %v1148 = vlaneseq
    %v1149 = vshrl.u32 %v1148, 7
    %v1150 = vsub.s32 0, %v1149
    %v1151 = vrot.slane %v114, %v1150
    %v1152 = vlaneseq
    %v1153 = vshrl.u32 %v1152, 7
    %v1154 = vsub.s32 1, %v1153
    %v1155 = vrot.slane %v114, %v1154
    %v1156 = vlaneseq
    %v1157 = vshrl.u32 %v1156, 7
    %v1158 = vsub.s32 2, %v1157
    %v1159 = vrot.slane %v114, %v1158
    %v1160 = vlaneseq
    %v1161 = vshrl.u32 %v1160, 7
    %v1162 = vsub.s32 3, %v1161
    %v1163 = vrot.slane %v114, %v1162
    %1168 = vmatprep.subr.mxu0 %v177
    %1169 = vmatpush1.msra.mxu0 %v176
    %1170 = vmatprep.subr.mxu0 %v173
    %1171 = vmatpush1.msra.mxu0 %v172
    %1172 = vmatprep.subr.mxu0 %v169
    %1173 = vmatpush1.msra.mxu0 %v168
    %1174 = vmatprep.subr.mxu0 %v165
    %1175 = vmatpush1.msra.mxu0 %v164
    %1176 = vmatprep.subr.mxu0 %v161
    %1177 = vmatpush1.msra.mxu0 %v160
    %1178 = vmatprep.subr.mxu0 %v157
    %1179 = vmatpush1.msra.mxu0 %v156
    %1180 = vmatprep.subr.mxu0 %v153
    %1181 = vmatpush1.msra.mxu0 %v152
    %1182 = vmatprep.subr.mxu0 %v149
    %1183 = vmatpush1.msra.mxu0 %v148
    %1184 = vmatprep.subr.mxu0 %v145
    %1185 = vmatpush1.msra.mxu0 %v144
    %1186 = vmatprep.subr.mxu0 %v141
    %1187 = vmatpush1.msra.mxu0 %v140
    %1188 = vmatprep.subr.mxu0 %v137
    %1189 = vmatpush1.msra.mxu0 %v136
    %1190 = vmatprep.subr.mxu0 %v133
    %1191 = vmatpush1.msra.mxu0 %v132
    %1192 = vmatprep.subr.mxu0 %v129
    %1193 = vmatpush1.msra.mxu0 %v128
    %1194 = vmatprep.subr.mxu0 %v125
    %1195 = vmatpush1.msra.mxu0 %v124
    %1196 = vmatprep.subr.mxu0 %v121
    %1197 = vmatpush1.msra.mxu0 %v120
    %1198 = vmatprep.subr.mxu0 %v117
    %1199 = vmatpush1.msra.mxu0 %v116
    %1200 = vmatprep.subr.mxu0 %v241
    %1201 = vmatpush2.msra.mxu0 %v240
    %1202 = vmatprep.subr.mxu0 %v237
    %1203 = vmatpush2.msra.mxu0 %v236
    %1204 = vmatprep.subr.mxu0 %v233
    %1205 = vmatpush2.msra.mxu0 %v232
    %1206 = vmatprep.subr.mxu0 %v229
    %1207 = vmatpush2.msra.mxu0 %v228
    %1208 = vmatprep.subr.mxu0 %v225
    %1209 = vmatpush2.msra.mxu0 %v224
    %1210 = vmatprep.subr.mxu0 %v221
    %1211 = vmatpush2.msra.mxu0 %v220
    %1212 = vmatprep.subr.mxu0 %v217
    %1213 = vmatpush2.msra.mxu0 %v216
    %1214 = vmatprep.subr.mxu0 %v213
    %1215 = vmatpush2.msra.mxu0 %v212
    %1216 = vmatprep.subr.mxu0 %v209
    %1217 = vmatpush2.msra.mxu0 %v208
    %1218 = vmatprep.subr.mxu0 %v205
    %1219 = vmatpush2.msra.mxu0 %v204
    %1220 = vmatprep.subr.mxu0 %v201
    %1221 = vmatpush2.msra.mxu0 %v200
    %1222 = vmatprep.subr.mxu0 %v197
    %1223 = vmatpush2.msra.mxu0 %v196
    %1224 = vmatprep.subr.mxu0 %v193
    %1225 = vmatpush2.msra.mxu0 %v192
    %1226 = vmatprep.subr.mxu0 %v189
    %1227 = vmatpush2.msra.mxu0 %v188
    %1228 = vmatprep.subr.mxu0 %v185
    %1229 = vmatpush2.msra.mxu0 %v184
    %1230 = vmatprep.subr.mxu0 %v181
    %1231 = vmatpush2.msra.mxu0 %v180
    %1232 = vmatprep.mubr.f32.mxu0 %v1140
    %1233 = vmatmul.mubr.f32.gmra.mxu0 %v1139
    %v1234 = vpop.f32.mrf.mxu0
    %v1235 = vadd.f32 %v1151, %v1234
    %v1236 = vpop.f32.mrf.mxu0
    %v1237 = vadd.f32 %v1155, %v1236
    %1238 = vmatprep.mubr.f32.mxu0 %v1144
    %1239 = vmatmul.mubr.f32.gmra.mxu0 %v1143
    %v1240 = vpop.f32.mrf.mxu0
    %v1241 = vadd.f32 %v1151, %v1240
    %v1242 = vpop.f32.mrf.mxu0
    %v1243 = vadd.f32 %v1155, %v1242
    %1244 = vdwg.mxu0
    %1245 = vmatprep.subr.mxu0 %v305
    %1246 = vmatpush1.msra.mxu0 %v304
    %1247 = vmatprep.subr.mxu0 %v301
    %1248 = vmatpush1.msra.mxu0 %v300
    %1249 = vmatprep.subr.mxu0 %v297
    %1250 = vmatpush1.msra.mxu0 %v296
    %1251 = vmatprep.subr.mxu0 %v293
    %1252 = vmatpush1.msra.mxu0 %v292
    %1253 = vmatprep.subr.mxu0 %v289
    %1254 = vmatpush1.msra.mxu0 %v288
    %1255 = vmatprep.subr.mxu0 %v285
    %1256 = vmatpush1.msra.mxu0 %v284
    %1257 = vmatprep.subr.mxu0 %v281
    %1258 = vmatpush1.msra.mxu0 %v280
    %1259 = vmatprep.subr.mxu0 %v277
    %1260 = vmatpush1.msra.mxu0 %v276
    %1261 = vmatprep.subr.mxu0 %v273
    %1262 = vmatpush1.msra.mxu0 %v272
    %1263 = vmatprep.subr.mxu0 %v269
    %1264 = vmatpush1.msra.mxu0 %v268
    %1265 = vmatprep.subr.mxu0 %v265
    %1266 = vmatpush1.msra.mxu0 %v264
    %1267 = vmatprep.subr.mxu0 %v261
    %1268 = vmatpush1.msra.mxu0 %v260
    %1269 = vmatprep.subr.mxu0 %v257
    %1270 = vmatpush1.msra.mxu0 %v256
    %1271 = vmatprep.subr.mxu0 %v253
    %1272 = vmatpush1.msra.mxu0 %v252
    %1273 = vmatprep.subr.mxu0 %v249
    %1274 = vmatpush1.msra.mxu0 %v248
    %1275 = vmatprep.subr.mxu0 %v245
    %1276 = vmatpush1.msra.mxu0 %v244
    %1277 = vmatprep.subr.mxu0 %v369
    %1278 = vmatpush2.msra.mxu0 %v368
    %1279 = vmatprep.subr.mxu0 %v365
    %1280 = vmatpush2.msra.mxu0 %v364
    %1281 = vmatprep.subr.mxu0 %v361
    %1282 = vmatpush2.msra.mxu0 %v360
    %1283 = vmatprep.subr.mxu0 %v357
    %1284 = vmatpush2.msra.mxu0 %v356
    %1285 = vmatprep.subr.mxu0 %v353
    %1286 = vmatpush2.msra.mxu0 %v352
    %1287 = vmatprep.subr.mxu0 %v349
    %1288 = vmatpush2.msra.mxu0 %v348
    %1289 = vmatprep.subr.mxu0 %v345
    %1290 = vmatpush2.msra.mxu0 %v344
    %1291 = vmatprep.subr.mxu0 %v341
    %1292 = vmatpush2.msra.mxu0 %v340
    %1293 = vmatprep.subr.mxu0 %v337
    %1294 = vmatpush2.msra.mxu0 %v336
    %1295 = vmatprep.subr.mxu0 %v333
    %1296 = vmatpush2.msra.mxu0 %v332
    %1297 = vmatprep.subr.mxu0 %v329
    %1298 = vmatpush2.msra.mxu0 %v328
    %1299 = vmatprep.subr.mxu0 %v325
    %1300 = vmatpush2.msra.mxu0 %v324
    %1301 = vmatprep.subr.mxu0 %v321
    %1302 = vmatpush2.msra.mxu0 %v320
    %1303 = vmatprep.subr.mxu0 %v317
    %1304 = vmatpush2.msra.mxu0 %v316
    %1305 = vmatprep.subr.mxu0 %v313
    %1306 = vmatpush2.msra.mxu0 %v312
    %1307 = vmatprep.subr.mxu0 %v309
    %1308 = vmatpush2.msra.mxu0 %v308
    %1309 = vmatprep.mubr.f32.mxu0 %v1142
    %1310 = vmatmul.mubr.f32.gmra.mxu0 %v1141
    %v1311 = vpop.f32.mrf.mxu0
    %v1312 = vadd.f32 %v1235, %v1311
    %v1313 = vpop.f32.mrf.mxu0
    %v1314 = vadd.f32 %v1237, %v1313
    %1315 = vmatprep.mubr.f32.mxu0 %v1146
    %1316 = vmatmul.mubr.f32.gmra.mxu0 %v1145
    %v1317 = vpop.f32.mrf.mxu0
    %v1318 = vadd.f32 %v1241, %v1317
    %v1319 = vpop.f32.mrf.mxu0
    %v1320 = vadd.f32 %v1243, %v1319
    %1321 = vdwg.mxu0
    %1322 = vmatprep.subr.mxu0 %v179
    %1323 = vmatpush1.msra.mxu0 %v178
    %1324 = vmatprep.subr.mxu0 %v175
    %1325 = vmatpush1.msra.mxu0 %v174
    %1326 = vmatprep.subr.mxu0 %v171
    %1327 = vmatpush1.msra.mxu0 %v170
    %1328 = vmatprep.subr.mxu0 %v167
    %1329 = vmatpush1.msra.mxu0 %v166
    %1330 = vmatprep.subr.mxu0 %v163
    %1331 = vmatpush1.msra.mxu0 %v162
    %1332 = vmatprep.subr.mxu0 %v159
    %1333 = vmatpush1.msra.mxu0 %v158
    %1334 = vmatprep.subr.mxu0 %v155
    %1335 = vmatpush1.msra.mxu0 %v154
    %1336 = vmatprep.subr.mxu0 %v151
    %1337 = vmatpush1.msra.mxu0 %v150
    %1338 = vmatprep.subr.mxu0 %v147
    %1339 = vmatpush1.msra.mxu0 %v146
    %1340 = vmatprep.subr.mxu0 %v143
    %1341 = vmatpush1.msra.mxu0 %v142
    %1342 = vmatprep.subr.mxu0 %v139
    %1343 = vmatpush1.msra.mxu0 %v138
    %1344 = vmatprep.subr.mxu0 %v135
    %1345 = vmatpush1.msra.mxu0 %v134
    %1346 = vmatprep.subr.mxu0 %v131
    %1347 = vmatpush1.msra.mxu0 %v130
    %1348 = vmatprep.subr.mxu0 %v127
    %1349 = vmatpush1.msra.mxu0 %v126
    %1350 = vmatprep.subr.mxu0 %v123
    %1351 = vmatpush1.msra.mxu0 %v122
    %1352 = vmatprep.subr.mxu0 %v119
    %1353 = vmatpush1.msra.mxu0 %v118
    %1354 = vmatprep.subr.mxu0 %v243
    %1355 = vmatpush2.msra.mxu0 %v242
    %1356 = vmatprep.subr.mxu0 %v239
    %1357 = vmatpush2.msra.mxu0 %v238
    %1358 = vmatprep.subr.mxu0 %v235
    %1359 = vmatpush2.msra.mxu0 %v234
    %1360 = vmatprep.subr.mxu0 %v231
    %1361 = vmatpush2.msra.mxu0 %v230
    %1362 = vmatprep.subr.mxu0 %v227
    %1363 = vmatpush2.msra.mxu0 %v226
    %1364 = vmatprep.subr.mxu0 %v223
    %1365 = vmatpush2.msra.mxu0 %v222
    %1366 = vmatprep.subr.mxu0 %v219
    %1367 = vmatpush2.msra.mxu0 %v218
    %1368 = vmatprep.subr.mxu0 %v215
    %1369 = vmatpush2.msra.mxu0 %v214
    %1370 = vmatprep.subr.mxu0 %v211
    %1371 = vmatpush2.msra.mxu0 %v210
    %1372 = vmatprep.subr.mxu0 %v207
    %1373 = vmatpush2.msra.mxu0 %v206
    %1374 = vmatprep.subr.mxu0 %v203
    %1375 = vmatpush2.msra.mxu0 %v202
    %1376 = vmatprep.subr.mxu0 %v199
    %1377 = vmatpush2.msra.mxu0 %v198
    %1378 = vmatprep.subr.mxu0 %v195
    %1379 = vmatpush2.msra.mxu0 %v194
    %1380 = vmatprep.subr.mxu0 %v191
    %1381 = vmatpush2.msra.mxu0 %v190
    %1382 = vmatprep.subr.mxu0 %v187
    %1383 = vmatpush2.msra.mxu0 %v186
    %1384 = vmatprep.subr.mxu0 %v183
    %1385 = vmatpush2.msra.mxu0 %v182
    %1386 = vmatprep.mubr.f32.mxu0 %v1140
    %1387 = vmatmul.mubr.f32.gmra.mxu0 %v1139
    %v1388 = vpop.f32.mrf.mxu0
    %v1389 = vadd.f32 %v1159, %v1388
    %v1390 = vpop.f32.mrf.mxu0
    %v1391 = vadd.f32 %v1163, %v1390
    %1392 = vmatprep.mubr.f32.mxu0 %v1144
    %1393 = vmatmul.mubr.f32.gmra.mxu0 %v1143
    %v1394 = vpop.f32.mrf.mxu0
    %v1395 = vadd.f32 %v1159, %v1394
    %v1396 = vpop.f32.mrf.mxu0
    %v1397 = vadd.f32 %v1163, %v1396
    %1398 = vdwg.mxu0
    %1399 = vmatprep.subr.mxu0 %v307
    %1400 = vmatpush1.msra.mxu0 %v306
    %1401 = vmatprep.subr.mxu0 %v303
    %1402 = vmatpush1.msra.mxu0 %v302
    %1403 = vmatprep.subr.mxu0 %v299
    %1404 = vmatpush1.msra.mxu0 %v298
    %1405 = vmatprep.subr.mxu0 %v295
    %1406 = vmatpush1.msra.mxu0 %v294
    %1407 = vmatprep.subr.mxu0 %v291
    %1408 = vmatpush1.msra.mxu0 %v290
    %1409 = vmatprep.subr.mxu0 %v287
    %1410 = vmatpush1.msra.mxu0 %v286
    %1411 = vmatprep.subr.mxu0 %v283
    %1412 = vmatpush1.msra.mxu0 %v282
    %1413 = vmatprep.subr.mxu0 %v279
    %1414 = vmatpush1.msra.mxu0 %v278
    %1415 = vmatprep.subr.mxu0 %v275
    %1416 = vmatpush1.msra.mxu0 %v274
    %1417 = vmatprep.subr.mxu0 %v271
    %1418 = vmatpush1.msra.mxu0 %v270
    %1419 = vmatprep.subr.mxu0 %v267
    %1420 = vmatpush1.msra.mxu0 %v266
    %1421 = vmatprep.subr.mxu0 %v263
    %1422 = vmatpush1.msra.mxu0 %v262
    %1423 = vmatprep.subr.mxu0 %v259
    %1424 = vmatpush1.msra.mxu0 %v258
    %1425 = vmatprep.subr.mxu0 %v255
    %1426 = vmatpush1.msra.mxu0 %v254
    %1427 = vmatprep.subr.mxu0 %v251
    %1428 = vmatpush1.msra.mxu0 %v250
    %1429 = vmatprep.subr.mxu0 %v247
    %1430 = vmatpush1.msra.mxu0 %v246
    %1431 = vmatprep.subr.mxu0 %v371
    %1432 = vmatpush2.msra.mxu0 %v370
    %1433 = vmatprep.subr.mxu0 %v367
    %1434 = vmatpush2.msra.mxu0 %v366
    %1435 = vmatprep.subr.mxu0 %v363
    %1436 = vmatpush2.msra.mxu0 %v362
    %1437 = vmatprep.subr.mxu0 %v359
    %1438 = vmatpush2.msra.mxu0 %v358
    %1439 = vmatprep.subr.mxu0 %v355
    %1440 = vmatpush2.msra.mxu0 %v354
    %1441 = vmatprep.subr.mxu0 %v351
    %1442 = vmatpush2.msra.mxu0 %v350
    %1443 = vmatprep.subr.mxu0 %v347
    %1444 = vmatpush2.msra.mxu0 %v346
    %1445 = vmatprep.subr.mxu0 %v343
    %1446 = vmatpush2.msra.mxu0 %v342
    %1447 = vmatprep.subr.mxu0 %v339
    %1448 = vmatpush2.msra.mxu0 %v338
    %1449 = vmatprep.subr.mxu0 %v335
    %1450 = vmatpush2.msra.mxu0 %v334
    %1451 = vmatprep.subr.mxu0 %v331
    %1452 = vmatpush2.msra.mxu0 %v330
    %1453 = vmatprep.subr.mxu0 %v327
    %1454 = vmatpush2.msra.mxu0 %v326
    %1455 = vmatprep.subr.mxu0 %v323
    %1456 = vmatpush2.msra.mxu0 %v322
    %1457 = vmatprep.subr.mxu0 %v319
    %1458 = vmatpush2.msra.mxu0 %v318
    %1459 = vmatprep.subr.mxu0 %v315
    %1460 = vmatpush2.msra.mxu0 %v314
    %1461 = vmatprep.subr.mxu0 %v311
    %1462 = vmatpush2.msra.mxu0 %v310
    %1463 = vmatprep.mubr.f32.mxu0 %v1142
    %1464 = vmatmul.mubr.f32.gmra.mxu0 %v1141
    %v1465 = vpop.f32.mrf.mxu0
    %v1466 = vadd.f32 %v1389, %v1465
    %v1467 = vpop.f32.mrf.mxu0
    %v1468 = vadd.f32 %v1391, %v1467
    %1469 = vmatprep.mubr.f32.mxu0 %v1146
    %1470 = vmatmul.mubr.f32.gmra.mxu0 %v1145
    %v1471 = vpop.f32.mrf.mxu0
    %v1472 = vadd.f32 %v1395, %v1471
    %v1473 = vpop.f32.mrf.mxu0
    %v1474 = vadd.f32 %v1397, %v1473
    %1475 = vdwg.mxu0
    %v1476 = vadd.f32 %v517, %v521
    %v1477 = vrot.slane %v1476, 4
    %v1478 = vadd.f32 %v1476, %v1477
    %v1479 = vrot.slane %v1478, 2
    %v1480 = vadd.f32 %v1478, %v1479
    %v1481 = vrot.slane %v1480, 1
    %v1482 = vadd.f32 %v1480, %v1481
    %v1483 = vadd.f32 %v518, %v522
    %v1484 = vrot.slane %v1483, 4
    %v1485 = vadd.f32 %v1483, %v1484
    %v1486 = vrot.slane %v1485, 2
    %v1487 = vadd.f32 %v1485, %v1486
    %v1488 = vrot.slane %v1487, 1
    %v1489 = vadd.f32 %v1487, %v1488
    %v1490 = vadd.f32 %v519, %v523
    %v1491 = vrot.slane %v1490, 4
    %v1492 = vadd.f32 %v1490, %v1491
    %v1493 = vrot.slane %v1492, 2
    %v1494 = vadd.f32 %v1492, %v1493
    %v1495 = vrot.slane %v1494, 1
    %v1496 = vadd.f32 %v1494, %v1495
    %v1497 = vadd.f32 %v520, %v524
    %v1498 = vrot.slane %v1497, 4
    %v1499 = vadd.f32 %v1497, %v1498
    %v1500 = vrot.slane %v1499, 2
    %v1501 = vadd.f32 %v1499, %v1500
    %v1502 = vrot.slane %v1501, 1
    %v1503 = vadd.f32 %v1501, %v1502
    %v1504 = vadd.f32 %v1482, 0.0
    %1506 = vrot.lane.b32.xlu0 %v1482, 96
    %v1507 = vpop.permute.xlu0 %1506
    %v1509 = vadd.f32 %v1504, %v1507
    %1510 = vrot.lane.b32.xlu0 %v1482, 64
    %v1511 = vpop.permute.xlu0 %1510
    %v1513 = vadd.f32 %v1509, %v1511
    %1514 = vrot.lane.b32.xlu0 %v1482, 32
    %v1515 = vpop.permute.xlu0 %1514
    %v1517 = vadd.f32 %v1513, %v1515
    %v1518 = vadd.f32 %v1517, %v1489
    %1520 = vrot.lane.b32.xlu0 %v1489, 96
    %v1521 = vpop.permute.xlu0 %1520
    %v1523 = vadd.f32 %v1518, %v1521
    %1524 = vrot.lane.b32.xlu0 %v1489, 64
    %v1525 = vpop.permute.xlu0 %1524
    %v1527 = vadd.f32 %v1523, %v1525
    %1528 = vrot.lane.b32.xlu0 %v1489, 32
    %v1529 = vpop.permute.xlu0 %1528
    %v1531 = vadd.f32 %v1527, %v1529
    %v1532 = vadd.f32 %v1531, %v1496
    %1534 = vrot.lane.b32.xlu0 %v1496, 96
    %v1535 = vpop.permute.xlu0 %1534
    %v1537 = vadd.f32 %v1532, %v1535
    %1538 = vrot.lane.b32.xlu0 %v1496, 64
    %v1539 = vpop.permute.xlu0 %1538
    %v1541 = vadd.f32 %v1537, %v1539
    %1542 = vrot.lane.b32.xlu0 %v1496, 32
    %v1543 = vpop.permute.xlu0 %1542
    %v1545 = vadd.f32 %v1541, %v1543
    %v1546 = vadd.f32 %v1545, %v1503
    %1548 = vrot.lane.b32.xlu0 %v1503, 96
    %v1549 = vpop.permute.xlu0 %1548
    %v1551 = vadd.f32 %v1546, %v1549
    %1552 = vrot.lane.b32.xlu0 %v1503, 64
    %v1553 = vpop.permute.xlu0 %1552
    %v1555 = vadd.f32 %v1551, %v1553
    %1556 = vrot.lane.b32.xlu0 %v1503, 32
    %v1557 = vpop.permute.xlu0 %1556
    %v1559 = vadd.f32 %v1555, %v1557
    %v1560 = vmul.f32 %v1559, 0.00390625
    %v1562 = vsel %vm578, %v1560, 0
    %1564 = vmatprep.subr.mxu0 0.0
    %1565 = vmatpush1.msra.mxu0 0.0
    %1566 = vmatprep.subr.mxu0 0.0
    %1567 = vmatpush1.msra.mxu0 0.0
    %1568 = vmatprep.subr.mxu0 0.0
    %1569 = vmatpush1.msra.mxu0 0.0
    %1570 = vmatprep.subr.mxu0 0.0
    %1571 = vmatpush1.msra.mxu0 0.0
    %1572 = vmatprep.subr.mxu0 0.0
    %1573 = vmatpush1.msra.mxu0 0.0
    %1574 = vmatprep.subr.mxu0 0.0
    %1575 = vmatpush1.msra.mxu0 0.0
    %1576 = vmatprep.subr.mxu0 0.0
    %1577 = vmatpush1.msra.mxu0 0.0
    %1578 = vmatprep.subr.mxu0 0.0
    %1579 = vmatpush1.msra.mxu0 0.0
    %1580 = vmatprep.subr.mxu0 0.0
    %1581 = vmatpush1.msra.mxu0 0.0
    %1582 = vmatprep.subr.mxu0 0.0
    %1583 = vmatpush1.msra.mxu0 0.0
    %1584 = vmatprep.subr.mxu0 0.0
    %1585 = vmatpush1.msra.mxu0 0.0
    %1586 = vmatprep.subr.mxu0 0.0
    %1587 = vmatpush1.msra.mxu0 0.0
    %1588 = vmatprep.subr.mxu0 0.0
    %1589 = vmatpush1.msra.mxu0 %v375
    %1590 = vmatprep.subr.mxu0 0.0
    %1591 = vmatpush1.msra.mxu0 %v374
    %1592 = vmatprep.subr.mxu0 0.0
    %1593 = vmatpush1.msra.mxu0 %v373
    %1594 = vmatprep.subr.mxu0 0.0
    %1595 = vmatpush1.msra.mxu0 %v372
    %1596 = vmatprep.subr.mxu0 0.0
    %1597 = vmatpush2.msra.mxu0 0.0
    %1598 = vmatprep.subr.mxu0 0.0
    %1599 = vmatpush2.msra.mxu0 0.0
    %1600 = vmatprep.subr.mxu0 0.0
    %1601 = vmatpush2.msra.mxu0 0.0
    %1602 = vmatprep.subr.mxu0 0.0
    %1603 = vmatpush2.msra.mxu0 0.0
    %1604 = vmatprep.subr.mxu0 0.0
    %1605 = vmatpush2.msra.mxu0 0.0
    %1606 = vmatprep.subr.mxu0 0.0
    %1607 = vmatpush2.msra.mxu0 0.0
    %1608 = vmatprep.subr.mxu0 0.0
    %1609 = vmatpush2.msra.mxu0 0.0
    %1610 = vmatprep.subr.mxu0 0.0
    %1611 = vmatpush2.msra.mxu0 0.0
    %1612 = vmatprep.subr.mxu0 0.0
    %1613 = vmatpush2.msra.mxu0 0.0
    %1614 = vmatprep.subr.mxu0 0.0
    %1615 = vmatpush2.msra.mxu0 0.0
    %1616 = vmatprep.subr.mxu0 0.0
    %1617 = vmatpush2.msra.mxu0 0.0
    %1618 = vmatprep.subr.mxu0 0.0
    %1619 = vmatpush2.msra.mxu0 0.0
    %1620 = vmatprep.subr.mxu0 0.0
    %1621 = vmatpush2.msra.mxu0 0.0
    %1622 = vmatprep.subr.mxu0 0.0
    %1623 = vmatpush2.msra.mxu0 0.0
    %1624 = vmatprep.subr.mxu0 0.0
    %1625 = vmatpush2.msra.mxu0 0.0
    %1626 = vmatprep.subr.mxu0 0.0
    %1627 = vmatpush2.msra.mxu0 0.0
    %1628 = vmatprep.mubr.f32.mxu0 0.0
    %1629 = vmatmul.mubr.f32.gmra.mxu0 %v1562
    %v1630 = vpop.f32.mrf.mxu0
    %v1631 = vadd.f32 %v115, %v1630
    %v1632 = vpop.f32.mrf.mxu0
    %1633 = vdwg.mxu0
    %v1634 = vxor.u32 %v1631, 2147483648
    %v1635 = vmul.f32 %v1634, 1.442695
    %v1636 = vpow.pop %v1635
    %v1637 = vadd.f32 %v1636, 1.0
    %v1638 = vrcp.pop %v1637
    %v1639 = vmul.f32 1.0, %v1638
    %1641 = vrot.lane.b32.xlu0 %v1639, 32
    %v1642 = vpop.permute.xlu0 %1641
    %1644 = vrot.lane.b32.xlu0 %v1639, 64
    %v1645 = vpop.permute.xlu0 %1644
    %1647 = vrot.lane.b32.xlu0 %v1639, 96
    %v1648 = vpop.permute.xlu0 %1647
    %v1650 = vsel %vm578, %v1639, %v1642
    %vm1651 = vcmask 523264
    %v1652 = vsel %vm1651, %v1650, %v1645
    %v1653 = vsel %vm685, %v1652, %v1648
    %v1654 = vlaneseq
    %v1655 = vshrl.u32 %v1654, 7
    %v1656 = vsub.s32 0, %v1655
    %v1657 = vrot.slane %v1653, %v1656
    %v1658 = vmul.f32 %v517, %v1657
    %v1659 = vmul.f32 %v518, %v1657
    %v1660 = vmul.f32 %v519, %v1657
    %v1661 = vmul.f32 %v520, %v1657
    %v1662 = vmul.f32 %v521, %v1657
    %v1663 = vmul.f32 %v522, %v1657
    %v1664 = vmul.f32 %v523, %v1657
    %v1665 = vmul.f32 %v524, %v1657
    %v1666 = vmul.f32 %v1312, %v1658
    %v1667 = vmul.f32 %v1314, %v1659
    %v1668 = vmul.f32 %v1466, %v1660
    %v1669 = vmul.f32 %v1468, %v1661
    %v1670 = vmul.f32 %v1318, %v1662
    %v1671 = vmul.f32 %v1320, %v1663
    %v1672 = vmul.f32 %v1472, %v1664
    %v1673 = vmul.f32 %v1474, %v1665
    %v1674 = vadd.f32 %v393, %v1666
    %v1675 = vadd.f32 %v394, %v1667
    %v1676 = vadd.f32 %v395, %v1668
    %v1677 = vadd.f32 %v396, %v1669
    %v1678 = vadd.f32 %v397, %v1670
    %v1679 = vadd.f32 %v398, %v1671
    %v1680 = vadd.f32 %v399, %v1672
    %v1681 = vadd.f32 %v400, %v1673
    %1682 = vst [vmem:[#allocation13] sm:$0xff] %v1674
    %1683 = vst [vmem:[#allocation13 + $0x8] sm:$0xff] %v1675
    %1684 = vst [vmem:[#allocation13 + $0x10] sm:$0xff] %v1676
    %1685 = vst [vmem:[#allocation13 + $0x18] sm:$0xff] %v1677
    %1686 = vst [vmem:[#allocation13 + $0x20] sm:$0xff] %v1678
    %1687 = vst [vmem:[#allocation13 + $0x28] sm:$0xff] %v1679
    %1688 = vst [vmem:[#allocation13 + $0x30] sm:$0xff] %v1680
    %1689 = vst [vmem:[#allocation13 + $0x38] sm:$0xff] %v1681
    %v1690 = vld [vmem:[#allocation2 + $0x40] sm:$0xff]
    %v1691 = vld [vmem:[#allocation2 + $0x48] sm:$0xff]
    %v1692 = vld [vmem:[#allocation2 + $0x50] sm:$0xff]
    %v1693 = vld [vmem:[#allocation2 + $0x58] sm:$0xff]
    %v1694 = vld [vmem:[#allocation2 + $0x60] sm:$0xff]
    %v1695 = vld [vmem:[#allocation2 + $0x68] sm:$0xff]
    %v1696 = vld [vmem:[#allocation2 + $0x70] sm:$0xff]
    %v1697 = vld [vmem:[#allocation2 + $0x78] sm:$0xff]
    %v1698 = vadd.f32 %v1690, %v1691
    %v1699 = vadd.f32 %v1698, %v1692
    %v1700 = vadd.f32 %v1699, %v1693
    %v1701 = vadd.f32 %v1700, %v1694
    %v1702 = vadd.f32 %v1701, %v1695
    %v1703 = vadd.f32 %v1702, %v1696
    %v1704 = vadd.f32 %v1703, %v1697
    %1705 = vadd.xlane.f32.xlu0 %v1704
    %v1706 = vpop.xlane.xlu0 %1705
    %v1707 = vrot.slane %v1706, 4
    %v1708 = vadd.f32 %v1706, %v1707
    %v1709 = vrot.slane %v1708, 2
    %v1710 = vadd.f32 %v1708, %v1709
    %v1711 = vrot.slane %v1710, 1
    %v1712 = vadd.f32 %v1710, %v1711
    %s1713 = vtos %v1712
    %v1714 = vmul.f32 %v1690, %v1690
    %v1715 = vmul.f32 %v1691, %v1691
    %v1716 = vmul.f32 %v1692, %v1692
    %v1717 = vmul.f32 %v1693, %v1693
    %v1718 = vmul.f32 %v1694, %v1694
    %v1719 = vmul.f32 %v1695, %v1695
    %v1720 = vmul.f32 %v1696, %v1696
    %v1721 = vmul.f32 %v1697, %v1697
    %v1722 = vadd.f32 %v1714, %v1715
    %v1723 = vadd.f32 %v1722, %v1716
    %v1724 = vadd.f32 %v1723, %v1717
    %v1725 = vadd.f32 %v1724, %v1718
    %v1726 = vadd.f32 %v1725, %v1719
    %v1727 = vadd.f32 %v1726, %v1720
    %v1728 = vadd.f32 %v1727, %v1721
    %1729 = vadd.xlane.f32.xlu0 %v1728
    %v1730 = vpop.xlane.xlu0 %1729
    %v1731 = vrot.slane %v1730, 4
    %v1732 = vadd.f32 %v1730, %v1731
    %v1733 = vrot.slane %v1732, 2
    %v1734 = vadd.f32 %v1732, %v1733
    %v1735 = vrot.slane %v1734, 1
    %v1736 = vadd.f32 %v1734, %v1735
    %s1737 = vtos %v1736
    %s1738 = smul.f32 %s1713, 0.00012207031
    %s1739 = smul.f32 %s1737, 0.00012207031
    %s1740 = smul.f32 %s1738, %s1738
    %s1741 = ssub.f32 %s1739, %s1740
    %v1742 = vstv %s1738
    %v1743 = vsub.f32 %v1690, %v1742
    %v1744 = vsub.f32 %v1691, %v1742
    %v1745 = vsub.f32 %v1692, %v1742
    %v1746 = vsub.f32 %v1693, %v1742
    %v1747 = vsub.f32 %v1694, %v1742
    %v1748 = vsub.f32 %v1695, %v1742
    %v1749 = vsub.f32 %v1696, %v1742
    %v1750 = vsub.f32 %v1697, %v1742
    %s1751 = sadd.f32 %s1741, 1e-05
    %v1752 = vstv %s1751
    %v1753 = vrsqrt.pop %v1752
    %s1754 = vtos %v1753
    %v1755 = vstv %s1754
    %v1756 = vmul.f32 %v1743, %v1755
    %v1757 = vmul.f32 %v1744, %v1755
    %v1758 = vmul.f32 %v1745, %v1755
    %v1759 = vmul.f32 %v1746, %v1755
    %v1760 = vmul.f32 %v1747, %v1755
    %v1761 = vmul.f32 %v1748, %v1755
    %v1762 = vmul.f32 %v1749, %v1755
    %v1763 = vmul.f32 %v1750, %v1755
    %v1764 = vmul.f32 %v1756, %v471
    %v1765 = vmul.f32 %v1757, %v475
    %v1766 = vmul.f32 %v1758, %v479
    %v1767 = vmul.f32 %v1759, %v483
    %v1768 = vmul.f32 %v1760, %v471
    %v1769 = vmul.f32 %v1761, %v475
    %v1770 = vmul.f32 %v1762, %v479
    %v1771 = vmul.f32 %v1763, %v483
    %v1772 = vadd.f32 %v1764, %v500
    %v1773 = vadd.f32 %v1765, %v504
    %v1774 = vadd.f32 %v1766, %v508
    %v1775 = vadd.f32 %v1767, %v512
    %v1776 = vadd.f32 %v1768, %v500
    %v1777 = vadd.f32 %v1769, %v504
    %v1778 = vadd.f32 %v1770, %v508
    %v1779 = vadd.f32 %v1771, %v512
    %v1788 = vrot.slane %v1772, 7
    %v1789 = vrot.slane %v1773, 7
    %v1790 = vrot.slane %v1774, 7
    %v1791 = vrot.slane %v1775, 7
    %v1792 = vrot.slane %v1776, 7
    %v1793 = vsel %vm533, %v1788, %v1792
    %v1794 = vrot.slane %v1777, 7
    %v1795 = vsel %vm533, %v1789, %v1794
    %v1796 = vrot.slane %v1778, 7
    %v1797 = vsel %vm533, %v1790, %v1796
    %v1798 = vrot.slane %v1779, 7
    %v1799 = vsel %vm533, %v1791, %v1798
    %v1808 = vsel %vm533, 0.0, %v1788
    %v1809 = vsel %vm533, 0.0, %v1789
    %v1810 = vsel %vm533, 0.0, %v1790
    %v1811 = vsel %vm533, 0.0, %v1791
    %1816 = vrot.lane.b32.xlu0 %v1808, 32
    %v1817 = vpop.permute.xlu0 %1816
    %1818 = vrot.lane.b32.xlu0 %v1809, 32
    %v1819 = vpop.permute.xlu0 %1818
    %1820 = vrot.lane.b32.xlu0 %v1810, 32
    %v1821 = vpop.permute.xlu0 %1820
    %1822 = vrot.lane.b32.xlu0 %v1811, 32
    %v1823 = vpop.permute.xlu0 %1822
    %1824 = vrot.lane.b32.xlu0 %v1793, 32
    %v1825 = vpop.permute.xlu0 %1824
    %1826 = vrot.lane.b32.xlu0 %v1795, 32
    %v1827 = vpop.permute.xlu0 %1826
    %1828 = vrot.lane.b32.xlu0 %v1797, 32
    %v1829 = vpop.permute.xlu0 %1828
    %1830 = vrot.lane.b32.xlu0 %v1799, 32
    %v1831 = vpop.permute.xlu0 %1830
    %v1832 = vsel %vm578, %v1817, %v1819
    %v1833 = vsel %vm578, %v1819, %v1821
    %v1834 = vsel %vm578, %v1821, %v1823
    %v1835 = vsel %vm578, %v1825, %v1827
    %v1836 = vsel %vm578, %v1827, %v1829
    %v1837 = vsel %vm578, %v1829, %v1831
    %v1846 = vsel %vm578, 0.0, %v1817
    %v1847 = vsel %vm578, 0.0, %v1825
    %v1848 = vmul.f32 %v1846, %v599
    %v1849 = vmul.f32 %v1832, %v603
    %v1850 = vmul.f32 %v1833, %v607
    %v1851 = vmul.f32 %v1834, %v611
    %v1852 = vmul.f32 %v1847, %v599
    %v1853 = vmul.f32 %v1835, %v603
    %v1854 = vmul.f32 %v1836, %v607
    %v1855 = vmul.f32 %v1837, %v611
    %v1856 = vadd.f32 %v1848, 0.0
    %v1857 = vadd.f32 %v1849, 0.0
    %v1858 = vadd.f32 %v1850, 0.0
    %v1859 = vadd.f32 %v1851, 0.0
    %v1860 = vadd.f32 %v1852, 0.0
    %v1861 = vadd.f32 %v1853, 0.0
    %v1862 = vadd.f32 %v1854, 0.0
    %v1863 = vadd.f32 %v1855, 0.0
    %v1864 = vmul.f32 %v1808, %v636
    %v1865 = vmul.f32 %v1809, %v640
    %v1866 = vmul.f32 %v1810, %v644
    %v1867 = vmul.f32 %v1811, %v648
    %v1868 = vmul.f32 %v1793, %v636
    %v1869 = vmul.f32 %v1795, %v640
    %v1870 = vmul.f32 %v1797, %v644
    %v1871 = vmul.f32 %v1799, %v648
    %v1872 = vadd.f32 %v1856, %v1864
    %v1873 = vadd.f32 %v1857, %v1865
    %v1874 = vadd.f32 %v1858, %v1866
    %v1875 = vadd.f32 %v1859, %v1867
    %v1876 = vadd.f32 %v1860, %v1868
    %v1877 = vadd.f32 %v1861, %v1869
    %v1878 = vadd.f32 %v1862, %v1870
    %v1879 = vadd.f32 %v1863, %v1871
    %1880 = vrot.lane.b32.xlu0 %v1808, 96
    %v1881 = vpop.permute.xlu0 %1880
    %1882 = vrot.lane.b32.xlu0 %v1809, 96
    %v1883 = vpop.permute.xlu0 %1882
    %1884 = vrot.lane.b32.xlu0 %v1810, 96
    %v1885 = vpop.permute.xlu0 %1884
    %1886 = vrot.lane.b32.xlu0 %v1811, 96
    %v1887 = vpop.permute.xlu0 %1886
    %1888 = vrot.lane.b32.xlu0 %v1793, 96
    %v1889 = vpop.permute.xlu0 %1888
    %1890 = vrot.lane.b32.xlu0 %v1795, 96
    %v1891 = vpop.permute.xlu0 %1890
    %1892 = vrot.lane.b32.xlu0 %v1797, 96
    %v1893 = vpop.permute.xlu0 %1892
    %1894 = vrot.lane.b32.xlu0 %v1799, 96
    %v1895 = vpop.permute.xlu0 %1894
    %v1896 = vsel %vm685, %v1881, %v1883
    %v1897 = vsel %vm685, %v1883, %v1885
    %v1898 = vsel %vm685, %v1885, %v1887
    %v1899 = vsel %vm685, %v1889, %v1891
    %v1900 = vsel %vm685, %v1891, %v1893
    %v1901 = vsel %vm685, %v1893, %v1895
    %v1910 = vsel %vm685, %v1887, 0.0
    %v1911 = vsel %vm685, %v1895, 0.0
    %v1912 = vmul.f32 %v1896, %v706
    %v1913 = vmul.f32 %v1897, %v710
    %v1914 = vmul.f32 %v1898, %v714
    %v1915 = vmul.f32 %v1910, %v718
    %v1916 = vmul.f32 %v1899, %v706
    %v1917 = vmul.f32 %v1900, %v710
    %v1918 = vmul.f32 %v1901, %v714
    %v1919 = vmul.f32 %v1911, %v718
    %v1920 = vadd.f32 %v1872, %v1912
    %v1921 = vadd.f32 %v1873, %v1913
    %v1922 = vadd.f32 %v1874, %v1914
    %v1923 = vadd.f32 %v1875, %v1915
    %v1924 = vadd.f32 %v1876, %v1916
    %v1925 = vadd.f32 %v1877, %v1917
    %v1926 = vadd.f32 %v1878, %v1918
    %v1927 = vadd.f32 %v1879, %v1919
    %1928 = vrot.lane.b32.xlu0 %v1772, 32
    %v1929 = vpop.permute.xlu0 %1928
    %1930 = vrot.lane.b32.xlu0 %v1773, 32
    %v1931 = vpop.permute.xlu0 %1930
    %1932 = vrot.lane.b32.xlu0 %v1774, 32
    %v1933 = vpop.permute.xlu0 %1932
    %1934 = vrot.lane.b32.xlu0 %v1775, 32
    %v1935 = vpop.permute.xlu0 %1934
    %1936 = vrot.lane.b32.xlu0 %v1776, 32
    %v1937 = vpop.permute.xlu0 %1936
    %1938 = vrot.lane.b32.xlu0 %v1777, 32
    %v1939 = vpop.permute.xlu0 %1938
    %1940 = vrot.lane.b32.xlu0 %v1778, 32
    %v1941 = vpop.permute.xlu0 %1940
    %1942 = vrot.lane.b32.xlu0 %v1779, 32
    %v1943 = vpop.permute.xlu0 %1942
    %v1944 = vsel %vm578, %v1929, %v1931
    %v1945 = vsel %vm578, %v1931, %v1933
    %v1946 = vsel %vm578, %v1933, %v1935
    %v1947 = vsel %vm578, %v1937, %v1939
    %v1948 = vsel %vm578, %v1939, %v1941
    %v1949 = vsel %vm578, %v1941, %v1943
    %v1958 = vsel %vm578, 0.0, %v1929
    %v1959 = vsel %vm578, 0.0, %v1937
    %v1960 = vmul.f32 %v1958, %v775
    %v1961 = vmul.f32 %v1944, %v779
    %v1962 = vmul.f32 %v1945, %v783
    %v1963 = vmul.f32 %v1946, %v787
    %v1964 = vmul.f32 %v1959, %v775
    %v1965 = vmul.f32 %v1947, %v779
    %v1966 = vmul.f32 %v1948, %v783
    %v1967 = vmul.f32 %v1949, %v787
    %v1968 = vadd.f32 %v1920, %v1960
    %v1969 = vadd.f32 %v1921, %v1961
    %v1970 = vadd.f32 %v1922, %v1962
    %v1971 = vadd.f32 %v1923, %v1963
    %v1972 = vadd.f32 %v1924, %v1964
    %v1973 = vadd.f32 %v1925, %v1965
    %v1974 = vadd.f32 %v1926, %v1966
    %v1975 = vadd.f32 %v1927, %v1967
    %v1976 = vmul.f32 %v1772, %v812
    %v1977 = vmul.f32 %v1773, %v816
    %v1978 = vmul.f32 %v1774, %v820
    %v1979 = vmul.f32 %v1775, %v824
    %v1980 = vmul.f32 %v1776, %v812
    %v1981 = vmul.f32 %v1777, %v816
    %v1982 = vmul.f32 %v1778, %v820
    %v1983 = vmul.f32 %v1779, %v824
    %v1984 = vadd.f32 %v1968, %v1976
    %v1985 = vadd.f32 %v1969, %v1977
    %v1986 = vadd.f32 %v1970, %v1978
    %v1987 = vadd.f32 %v1971, %v1979
    %v1988 = vadd.f32 %v1972, %v1980
    %v1989 = vadd.f32 %v1973, %v1981
    %v1990 = vadd.f32 %v1974, %v1982
    %v1991 = vadd.f32 %v1975, %v1983
    %1992 = vrot.lane.b32.xlu0 %v1772, 96
    %v1993 = vpop.permute.xlu0 %1992
    %1994 = vrot.lane.b32.xlu0 %v1773, 96
    %v1995 = vpop.permute.xlu0 %1994
    %1996 = vrot.lane.b32.xlu0 %v1774, 96
    %v1997 = vpop.permute.xlu0 %1996
    %1998 = vrot.lane.b32.xlu0 %v1775, 96
    %v1999 = vpop.permute.xlu0 %1998
    %2000 = vrot.lane.b32.xlu0 %v1776, 96
    %v2001 = vpop.permute.xlu0 %2000
    %2002 = vrot.lane.b32.xlu0 %v1777, 96
    %v2003 = vpop.permute.xlu0 %2002
    %2004 = vrot.lane.b32.xlu0 %v1778, 96
    %v2005 = vpop.permute.xlu0 %2004
    %2006 = vrot.lane.b32.xlu0 %v1779, 96
    %v2007 = vpop.permute.xlu0 %2006
    %v2008 = vsel %vm685, %v1993, %v1995
    %v2009 = vsel %vm685, %v1995, %v1997
    %v2010 = vsel %vm685, %v1997, %v1999
    %v2011 = vsel %vm685, %v2001, %v2003
    %v2012 = vsel %vm685, %v2003, %v2005
    %v2013 = vsel %vm685, %v2005, %v2007
    %v2022 = vsel %vm685, %v1999, 0.0
    %v2023 = vsel %vm685, %v2007, 0.0
    %v2024 = vmul.f32 %v2008, %v881
    %v2025 = vmul.f32 %v2009, %v885
    %v2026 = vmul.f32 %v2010, %v889
    %v2027 = vmul.f32 %v2022, %v893
    %v2028 = vmul.f32 %v2011, %v881
    %v2029 = vmul.f32 %v2012, %v885
    %v2030 = vmul.f32 %v2013, %v889
    %v2031 = vmul.f32 %v2023, %v893
    %v2032 = vadd.f32 %v1984, %v2024
    %v2033 = vadd.f32 %v1985, %v2025
    %v2034 = vadd.f32 %v1986, %v2026
    %v2035 = vadd.f32 %v1987, %v2027
    %v2036 = vadd.f32 %v1988, %v2028
    %v2037 = vadd.f32 %v1989, %v2029
    %v2038 = vadd.f32 %v1990, %v2030
    %v2039 = vadd.f32 %v1991, %v2031
    %v2040 = vrot.slane %v1772, 1
    %v2041 = vrot.slane %v1776, 1
    %v2042 = vsel %vm914, %v2040, %v2041
    %v2043 = vrot.slane %v1773, 1
    %v2044 = vrot.slane %v1777, 1
    %v2045 = vsel %vm914, %v2043, %v2044
    %v2046 = vrot.slane %v1774, 1
    %v2047 = vrot.slane %v1778, 1
    %v2048 = vsel %vm914, %v2046, %v2047
    %v2049 = vrot.slane %v1775, 1
    %v2050 = vrot.slane %v1779, 1
    %v2051 = vsel %vm914, %v2049, %v2050
    %v2060 = vsel %vm914, %v2041, 0.0
    %v2061 = vsel %vm914, %v2044, 0.0
    %v2062 = vsel %vm914, %v2047, 0.0
    %v2063 = vsel %vm914, %v2050, 0.0
    %2068 = vrot.lane.b32.xlu0 %v2042, 32
    %v2069 = vpop.permute.xlu0 %2068
    %2070 = vrot.lane.b32.xlu0 %v2045, 32
    %v2071 = vpop.permute.xlu0 %2070
    %2072 = vrot.lane.b32.xlu0 %v2048, 32
    %v2073 = vpop.permute.xlu0 %2072
    %2074 = vrot.lane.b32.xlu0 %v2051, 32
    %v2075 = vpop.permute.xlu0 %2074
    %2076 = vrot.lane.b32.xlu0 %v2060, 32
    %v2077 = vpop.permute.xlu0 %2076
    %2078 = vrot.lane.b32.xlu0 %v2061, 32
    %v2079 = vpop.permute.xlu0 %2078
    %2080 = vrot.lane.b32.xlu0 %v2062, 32
    %v2081 = vpop.permute.xlu0 %2080
    %2082 = vrot.lane.b32.xlu0 %v2063, 32
    %v2083 = vpop.permute.xlu0 %2082
    %v2084 = vsel %vm578, %v2069, %v2071
    %v2085 = vsel %vm578, %v2071, %v2073
    %v2086 = vsel %vm578, %v2073, %v2075
    %v2087 = vsel %vm578, %v2077, %v2079
    %v2088 = vsel %vm578, %v2079, %v2081
    %v2089 = vsel %vm578, %v2081, %v2083
    %v2098 = vsel %vm578, 0.0, %v2069
    %v2099 = vsel %vm578, 0.0, %v2077
    %v2100 = vmul.f32 %v2098, %v979
    %v2101 = vmul.f32 %v2084, %v983
    %v2102 = vmul.f32 %v2085, %v987
    %v2103 = vmul.f32 %v2086, %v991
    %v2104 = vmul.f32 %v2099, %v979
    %v2105 = vmul.f32 %v2087, %v983
    %v2106 = vmul.f32 %v2088, %v987
    %v2107 = vmul.f32 %v2089, %v991
    %v2108 = vadd.f32 %v2032, %v2100
    %v2109 = vadd.f32 %v2033, %v2101
    %v2110 = vadd.f32 %v2034, %v2102
    %v2111 = vadd.f32 %v2035, %v2103
    %v2112 = vadd.f32 %v2036, %v2104
    %v2113 = vadd.f32 %v2037, %v2105
    %v2114 = vadd.f32 %v2038, %v2106
    %v2115 = vadd.f32 %v2039, %v2107
    %v2116 = vmul.f32 %v2042, %v1016
    %v2117 = vmul.f32 %v2045, %v1020
    %v2118 = vmul.f32 %v2048, %v1024
    %v2119 = vmul.f32 %v2051, %v1028
    %v2120 = vmul.f32 %v2060, %v1016
    %v2121 = vmul.f32 %v2061, %v1020
    %v2122 = vmul.f32 %v2062, %v1024
    %v2123 = vmul.f32 %v2063, %v1028
    %v2124 = vadd.f32 %v2108, %v2116
    %v2125 = vadd.f32 %v2109, %v2117
    %v2126 = vadd.f32 %v2110, %v2118
    %v2127 = vadd.f32 %v2111, %v2119
    %v2128 = vadd.f32 %v2112, %v2120
    %v2129 = vadd.f32 %v2113, %v2121
    %v2130 = vadd.f32 %v2114, %v2122
    %v2131 = vadd.f32 %v2115, %v2123
    %2132 = vrot.lane.b32.xlu0 %v2042, 96
    %v2133 = vpop.permute.xlu0 %2132
    %2134 = vrot.lane.b32.xlu0 %v2045, 96
    %v2135 = vpop.permute.xlu0 %2134
    %2136 = vrot.lane.b32.xlu0 %v2048, 96
    %v2137 = vpop.permute.xlu0 %2136
    %2138 = vrot.lane.b32.xlu0 %v2051, 96
    %v2139 = vpop.permute.xlu0 %2138
    %2140 = vrot.lane.b32.xlu0 %v2060, 96
    %v2141 = vpop.permute.xlu0 %2140
    %2142 = vrot.lane.b32.xlu0 %v2061, 96
    %v2143 = vpop.permute.xlu0 %2142
    %2144 = vrot.lane.b32.xlu0 %v2062, 96
    %v2145 = vpop.permute.xlu0 %2144
    %2146 = vrot.lane.b32.xlu0 %v2063, 96
    %v2147 = vpop.permute.xlu0 %2146
    %v2148 = vsel %vm685, %v2133, %v2135
    %v2149 = vsel %vm685, %v2135, %v2137
    %v2150 = vsel %vm685, %v2137, %v2139
    %v2151 = vsel %vm685, %v2141, %v2143
    %v2152 = vsel %vm685, %v2143, %v2145
    %v2153 = vsel %vm685, %v2145, %v2147
    %v2162 = vsel %vm685, %v2139, 0.0
    %v2163 = vsel %vm685, %v2147, 0.0
    %v2164 = vmul.f32 %v2148, %v1085
    %v2165 = vmul.f32 %v2149, %v1089
    %v2166 = vmul.f32 %v2150, %v1093
    %v2167 = vmul.f32 %v2162, %v1097
    %v2168 = vmul.f32 %v2151, %v1085
    %v2169 = vmul.f32 %v2152, %v1089
    %v2170 = vmul.f32 %v2153, %v1093
    %v2171 = vmul.f32 %v2163, %v1097
    %v2172 = vadd.f32 %v2124, %v2164
    %v2173 = vadd.f32 %v2125, %v2165
    %v2174 = vadd.f32 %v2126, %v2166
    %v2175 = vadd.f32 %v2127, %v2167
    %v2176 = vadd.f32 %v2128, %v2168
    %v2177 = vadd.f32 %v2129, %v2169
    %v2178 = vadd.f32 %v2130, %v2170
    %v2179 = vadd.f32 %v2131, %v2171
    %v2180 = vadd.f32 %v2172, %v1122
    %v2181 = vadd.f32 %v2173, %v1126
    %v2182 = vadd.f32 %v2174, %v1130
    %v2183 = vadd.f32 %v2175, %v1134
    %v2184 = vadd.f32 %v2176, %v1122
    %v2185 = vadd.f32 %v2177, %v1126
    %v2186 = vadd.f32 %v2178, %v1130
    %v2187 = vadd.f32 %v2179, %v1134
    %2188 = vmatprep.subr.mxu0 %v177
    %2189 = vmatpush1.msra.mxu0 %v176
    %2190 = vmatprep.subr.mxu0 %v173
    %2191 = vmatpush1.msra.mxu0 %v172
    %2192 = vmatprep.subr.mxu0 %v169
    %2193 = vmatpush1.msra.mxu0 %v168
    %2194 = vmatprep.subr.mxu0 %v165
    %2195 = vmatpush1.msra.mxu0 %v164
    %2196 = vmatprep.subr.mxu0 %v161
    %2197 = vmatpush1.msra.mxu0 %v160
    %2198 = vmatprep.subr.mxu0 %v157
    %2199 = vmatpush1.msra.mxu0 %v156
    %2200 = vmatprep.subr.mxu0 %v153
    %2201 = vmatpush1.msra.mxu0 %v152
    %2202 = vmatprep.subr.mxu0 %v149
    %2203 = vmatpush1.msra.mxu0 %v148
    %2204 = vmatprep.subr.mxu0 %v145
    %2205 = vmatpush1.msra.mxu0 %v144
    %2206 = vmatprep.subr.mxu0 %v141
    %2207 = vmatpush1.msra.mxu0 %v140
    %2208 = vmatprep.subr.mxu0 %v137
    %2209 = vmatpush1.msra.mxu0 %v136
    %2210 = vmatprep.subr.mxu0 %v133
    %2211 = vmatpush1.msra.mxu0 %v132
    %2212 = vmatprep.subr.mxu0 %v129
    %2213 = vmatpush1.msra.mxu0 %v128
    %2214 = vmatprep.subr.mxu0 %v125
    %2215 = vmatpush1.msra.mxu0 %v124
    %2216 = vmatprep.subr.mxu0 %v121
    %2217 = vmatpush1.msra.mxu0 %v120
    %2218 = vmatprep.subr.mxu0 %v117
    %2219 = vmatpush1.msra.mxu0 %v116
    %2220 = vmatprep.subr.mxu0 %v241
    %2221 = vmatpush2.msra.mxu0 %v240
    %2222 = vmatprep.subr.mxu0 %v237
    %2223 = vmatpush2.msra.mxu0 %v236
    %2224 = vmatprep.subr.mxu0 %v233
    %2225 = vmatpush2.msra.mxu0 %v232
    %2226 = vmatprep.subr.mxu0 %v229
    %2227 = vmatpush2.msra.mxu0 %v228
    %2228 = vmatprep.subr.mxu0 %v225
    %2229 = vmatpush2.msra.mxu0 %v224
    %2230 = vmatprep.subr.mxu0 %v221
    %2231 = vmatpush2.msra.mxu0 %v220
    %2232 = vmatprep.subr.mxu0 %v217
    %2233 = vmatpush2.msra.mxu0 %v216
    %2234 = vmatprep.subr.mxu0 %v213
    %2235 = vmatpush2.msra.mxu0 %v212
    %2236 = vmatprep.subr.mxu0 %v209
    %2237 = vmatpush2.msra.mxu0 %v208
    %2238 = vmatprep.subr.mxu0 %v205
    %2239 = vmatpush2.msra.mxu0 %v204
    %2240 = vmatprep.subr.mxu0 %v201
    %2241 = vmatpush2.msra.mxu0 %v200
    %2242 = vmatprep.subr.mxu0 %v197
    %2243 = vmatpush2.msra.mxu0 %v196
    %2244 = vmatprep.subr.mxu0 %v193
    %2245 = vmatpush2.msra.mxu0 %v192
    %2246 = vmatprep.subr.mxu0 %v189
    %2247 = vmatpush2.msra.mxu0 %v188
    %2248 = vmatprep.subr.mxu0 %v185
    %2249 = vmatpush2.msra.mxu0 %v184
    %2250 = vmatprep.subr.mxu0 %v181
    %2251 = vmatpush2.msra.mxu0 %v180
    %2252 = vmatprep.mubr.f32.mxu0 %v2181
    %2253 = vmatmul.mubr.f32.gmra.mxu0 %v2180
    %v2254 = vpop.f32.mrf.mxu0
    %v2255 = vadd.f32 %v1151, %v2254
    %v2256 = vpop.f32.mrf.mxu0
    %v2257 = vadd.f32 %v1155, %v2256
    %2258 = vmatprep.mubr.f32.mxu0 %v2185
    %2259 = vmatmul.mubr.f32.gmra.mxu0 %v2184
    %v2260 = vpop.f32.mrf.mxu0
    %v2261 = vadd.f32 %v1151, %v2260
    %v2262 = vpop.f32.mrf.mxu0
    %v2263 = vadd.f32 %v1155, %v2262
    %2264 = vdwg.mxu0
    %2265 = vmatprep.subr.mxu0 %v305
    %2266 = vmatpush1.msra.mxu0 %v304
    %2267 = vmatprep.subr.mxu0 %v301
    %2268 = vmatpush1.msra.mxu0 %v300
    %2269 = vmatprep.subr.mxu0 %v297
    %2270 = vmatpush1.msra.mxu0 %v296
    %2271 = vmatprep.subr.mxu0 %v293
    %2272 = vmatpush1.msra.mxu0 %v292
    %2273 = vmatprep.subr.mxu0 %v289
    %2274 = vmatpush1.msra.mxu0 %v288
    %2275 = vmatprep.subr.mxu0 %v285
    %2276 = vmatpush1.msra.mxu0 %v284
    %2277 = vmatprep.subr.mxu0 %v281
    %2278 = vmatpush1.msra.mxu0 %v280
    %2279 = vmatprep.subr.mxu0 %v277
    %2280 = vmatpush1.msra.mxu0 %v276
    %2281 = vmatprep.subr.mxu0 %v273
    %2282 = vmatpush1.msra.mxu0 %v272
    %2283 = vmatprep.subr.mxu0 %v269
    %2284 = vmatpush1.msra.mxu0 %v268
    %2285 = vmatprep.subr.mxu0 %v265
    %2286 = vmatpush1.msra.mxu0 %v264
    %2287 = vmatprep.subr.mxu0 %v261
    %2288 = vmatpush1.msra.mxu0 %v260
    %2289 = vmatprep.subr.mxu0 %v257
    %2290 = vmatpush1.msra.mxu0 %v256
    %2291 = vmatprep.subr.mxu0 %v253
    %2292 = vmatpush1.msra.mxu0 %v252
    %2293 = vmatprep.subr.mxu0 %v249
    %2294 = vmatpush1.msra.mxu0 %v248
    %2295 = vmatprep.subr.mxu0 %v245
    %2296 = vmatpush1.msra.mxu0 %v244
    %2297 = vmatprep.subr.mxu0 %v369
    %2298 = vmatpush2.msra.mxu0 %v368
    %2299 = vmatprep.subr.mxu0 %v365
    %2300 = vmatpush2.msra.mxu0 %v364
    %2301 = vmatprep.subr.mxu0 %v361
    %2302 = vmatpush2.msra.mxu0 %v360
    %2303 = vmatprep.subr.mxu0 %v357
    %2304 = vmatpush2.msra.mxu0 %v356
    %2305 = vmatprep.subr.mxu0 %v353
    %2306 = vmatpush2.msra.mxu0 %v352
    %2307 = vmatprep.subr.mxu0 %v349
    %2308 = vmatpush2.msra.mxu0 %v348
    %2309 = vmatprep.subr.mxu0 %v345
    %2310 = vmatpush2.msra.mxu0 %v344
    %2311 = vmatprep.subr.mxu0 %v341
    %2312 = vmatpush2.msra.mxu0 %v340
    %2313 = vmatprep.subr.mxu0 %v337
    %2314 = vmatpush2.msra.mxu0 %v336
    %2315 = vmatprep.subr.mxu0 %v333
    %2316 = vmatpush2.msra.mxu0 %v332
    %2317 = vmatprep.subr.mxu0 %v329
    %2318 = vmatpush2.msra.mxu0 %v328
    %2319 = vmatprep.subr.mxu0 %v325
    %2320 = vmatpush2.msra.mxu0 %v324
    %2321 = vmatprep.subr.mxu0 %v321
    %2322 = vmatpush2.msra.mxu0 %v320
    %2323 = vmatprep.subr.mxu0 %v317
    %2324 = vmatpush2.msra.mxu0 %v316
    %2325 = vmatprep.subr.mxu0 %v313
    %2326 = vmatpush2.msra.mxu0 %v312
    %2327 = vmatprep.subr.mxu0 %v309
    %2328 = vmatpush2.msra.mxu0 %v308
    %2329 = vmatprep.mubr.f32.mxu0 %v2183
    %2330 = vmatmul.mubr.f32.gmra.mxu0 %v2182
    %v2331 = vpop.f32.mrf.mxu0
    %v2332 = vadd.f32 %v2255, %v2331
    %v2333 = vpop.f32.mrf.mxu0
    %v2334 = vadd.f32 %v2257, %v2333
    %2335 = vmatprep.mubr.f32.mxu0 %v2187
    %2336 = vmatmul.mubr.f32.gmra.mxu0 %v2186
    %v2337 = vpop.f32.mrf.mxu0
    %v2338 = vadd.f32 %v2261, %v2337
    %v2339 = vpop.f32.mrf.mxu0
    %v2340 = vadd.f32 %v2263, %v2339
    %2341 = vdwg.mxu0
    %2342 = vmatprep.subr.mxu0 %v179
    %2343 = vmatpush1.msra.mxu0 %v178
    %2344 = vmatprep.subr.mxu0 %v175
    %2345 = vmatpush1.msra.mxu0 %v174
    %2346 = vmatprep.subr.mxu0 %v171
    %2347 = vmatpush1.msra.mxu0 %v170
    %2348 = vmatprep.subr.mxu0 %v167
    %2349 = vmatpush1.msra.mxu0 %v166
    %2350 = vmatprep.subr.mxu0 %v163
    %2351 = vmatpush1.msra.mxu0 %v162
    %2352 = vmatprep.subr.mxu0 %v159
    %2353 = vmatpush1.msra.mxu0 %v158
    %2354 = vmatprep.subr.mxu0 %v155
    %2355 = vmatpush1.msra.mxu0 %v154
    %2356 = vmatprep.subr.mxu0 %v151
    %2357 = vmatpush1.msra.mxu0 %v150
    %2358 = vmatprep.subr.mxu0 %v147
    %2359 = vmatpush1.msra.mxu0 %v146
    %2360 = vmatprep.subr.mxu0 %v143
    %2361 = vmatpush1.msra.mxu0 %v142
    %2362 = vmatprep.subr.mxu0 %v139
    %2363 = vmatpush1.msra.mxu0 %v138
    %2364 = vmatprep.subr.mxu0 %v135
    %2365 = vmatpush1.msra.mxu0 %v134
    %2366 = vmatprep.subr.mxu0 %v131
    %2367 = vmatpush1.msra.mxu0 %v130
    %2368 = vmatprep.subr.mxu0 %v127
    %2369 = vmatpush1.msra.mxu0 %v126
    %2370 = vmatprep.subr.mxu0 %v123
    %2371 = vmatpush1.msra.mxu0 %v122
    %2372 = vmatprep.subr.mxu0 %v119
    %2373 = vmatpush1.msra.mxu0 %v118
    %2374 = vmatprep.subr.mxu0 %v243
    %2375 = vmatpush2.msra.mxu0 %v242
    %2376 = vmatprep.subr.mxu0 %v239
    %2377 = vmatpush2.msra.mxu0 %v238
    %2378 = vmatprep.subr.mxu0 %v235
    %2379 = vmatpush2.msra.mxu0 %v234
    %2380 = vmatprep.subr.mxu0 %v231
    %2381 = vmatpush2.msra.mxu0 %v230
    %2382 = vmatprep.subr.mxu0 %v227
    %2383 = vmatpush2.msra.mxu0 %v226
    %2384 = vmatprep.subr.mxu0 %v223
    %2385 = vmatpush2.msra.mxu0 %v222
    %2386 = vmatprep.subr.mxu0 %v219
    %2387 = vmatpush2.msra.mxu0 %v218
    %2388 = vmatprep.subr.mxu0 %v215
    %2389 = vmatpush2.msra.mxu0 %v214
    %2390 = vmatprep.subr.mxu0 %v211
    %2391 = vmatpush2.msra.mxu0 %v210
    %2392 = vmatprep.subr.mxu0 %v207
    %2393 = vmatpush2.msra.mxu0 %v206
    %2394 = vmatprep.subr.mxu0 %v203
    %2395 = vmatpush2.msra.mxu0 %v202
    %2396 = vmatprep.subr.mxu0 %v199
    %2397 = vmatpush2.msra.mxu0 %v198
    %2398 = vmatprep.subr.mxu0 %v195
    %2399 = vmatpush2.msra.mxu0 %v194
    %2400 = vmatprep.subr.mxu0 %v191
    %2401 = vmatpush2.msra.mxu0 %v190
    %2402 = vmatprep.subr.mxu0 %v187
    %2403 = vmatpush2.msra.mxu0 %v186
    %2404 = vmatprep.subr.mxu0 %v183
    %2405 = vmatpush2.msra.mxu0 %v182
    %2406 = vmatprep.mubr.f32.mxu0 %v2181
    %2407 = vmatmul.mubr.f32.gmra.mxu0 %v2180
    %v2408 = vpop.f32.mrf.mxu0
    %v2409 = vadd.f32 %v1159, %v2408
    %v2410 = vpop.f32.mrf.mxu0
    %v2411 = vadd.f32 %v1163, %v2410
    %2412 = vmatprep.mubr.f32.mxu0 %v2185
    %2413 = vmatmul.mubr.f32.gmra.mxu0 %v2184
    %v2414 = vpop.f32.mrf.mxu0
    %v2415 = vadd.f32 %v1159, %v2414
    %v2416 = vpop.f32.mrf.mxu0
    %v2417 = vadd.f32 %v1163, %v2416
    %2418 = vdwg.mxu0
    %2419 = vmatprep.subr.mxu0 %v307
    %2420 = vmatpush1.msra.mxu0 %v306
    %2421 = vmatprep.subr.mxu0 %v303
    %2422 = vmatpush1.msra.mxu0 %v302
    %2423 = vmatprep.subr.mxu0 %v299
    %2424 = vmatpush1.msra.mxu0 %v298
    %2425 = vmatprep.subr.mxu0 %v295
    %2426 = vmatpush1.msra.mxu0 %v294
    %2427 = vmatprep.subr.mxu0 %v291
    %2428 = vmatpush1.msra.mxu0 %v290
    %2429 = vmatprep.subr.mxu0 %v287
    %2430 = vmatpush1.msra.mxu0 %v286
    %2431 = vmatprep.subr.mxu0 %v283
    %2432 = vmatpush1.msra.mxu0 %v282
    %2433 = vmatprep.subr.mxu0 %v279
    %2434 = vmatpush1.msra.mxu0 %v278
    %2435 = vmatprep.subr.mxu0 %v275
    %2436 = vmatpush1.msra.mxu0 %v274
    %2437 = vmatprep.subr.mxu0 %v271
    %2438 = vmatpush1.msra.mxu0 %v270
    %2439 = vmatprep.subr.mxu0 %v267
    %2440 = vmatpush1.msra.mxu0 %v266
    %2441 = vmatprep.subr.mxu0 %v263
    %2442 = vmatpush1.msra.mxu0 %v262
    %2443 = vmatprep.subr.mxu0 %v259
    %2444 = vmatpush1.msra.mxu0 %v258
    %2445 = vmatprep.subr.mxu0 %v255
    %2446 = vmatpush1.msra.mxu0 %v254
    %2447 = vmatprep.subr.mxu0 %v251
    %2448 = vmatpush1.msra.mxu0 %v250
    %2449 = vmatprep.subr.mxu0 %v247
    %2450 = vmatpush1.msra.mxu0 %v246
    %2451 = vmatprep.subr.mxu0 %v371
    %2452 = vmatpush2.msra.mxu0 %v370
    %2453 = vmatprep.subr.mxu0 %v367
    %2454 = vmatpush2.msra.mxu0 %v366
    %2455 = vmatprep.subr.mxu0 %v363
    %2456 = vmatpush2.msra.mxu0 %v362
    %2457 = vmatprep.subr.mxu0 %v359
    %2458 = vmatpush2.msra.mxu0 %v358
    %2459 = vmatprep.subr.mxu0 %v355
    %2460 = vmatpush2.msra.mxu0 %v354
    %2461 = vmatprep.subr.mxu0 %v351
    %2462 = vmatpush2.msra.mxu0 %v350
    %2463 = vmatprep.subr.mxu0 %v347
    %2464 = vmatpush2.msra.mxu0 %v346
    %2465 = vmatprep.subr.mxu0 %v343
    %2466 = vmatpush2.msra.mxu0 %v342
    %2467 = vmatprep.subr.mxu0 %v339
    %2468 = vmatpush2.msra.mxu0 %v338
    %2469 = vmatprep.subr.mxu0 %v335
    %2470 = vmatpush2.msra.mxu0 %v334
    %2471 = vmatprep.subr.mxu0 %v331
    %2472 = vmatpush2.msra.mxu0 %v330
    %2473 = vmatprep.subr.mxu0 %v327
    %2474 = vmatpush2.msra.mxu0 %v326
    %2475 = vmatprep.subr.mxu0 %v323
    %2476 = vmatpush2.msra.mxu0 %v322
    %2477 = vmatprep.subr.mxu0 %v319
    %2478 = vmatpush2.msra.mxu0 %v318
    %2479 = vmatprep.subr.mxu0 %v315
    %2480 = vmatpush2.msra.mxu0 %v314
    %2481 = vmatprep.subr.mxu0 %v311
    %2482 = vmatpush2.msra.mxu0 %v310
    %2483 = vmatprep.mubr.f32.mxu0 %v2183
    %2484 = vmatmul.mubr.f32.gmra.mxu0 %v2182
    %v2485 = vpop.f32.mrf.mxu0
    %v2486 = vadd.f32 %v2409, %v2485
    %v2487 = vpop.f32.mrf.mxu0
    %v2488 = vadd.f32 %v2411, %v2487
    %2489 = vmatprep.mubr.f32.mxu0 %v2187
    %2490 = vmatmul.mubr.f32.gmra.mxu0 %v2186
    %v2491 = vpop.f32.mrf.mxu0
    %v2492 = vadd.f32 %v2415, %v2491
    %v2493 = vpop.f32.mrf.mxu0
    %v2494 = vadd.f32 %v2417, %v2493
    %2495 = vdwg.mxu0
    %v2496 = vadd.f32 %v1772, %v1776
    %v2497 = vrot.slane %v2496, 4
    %v2498 = vadd.f32 %v2496, %v2497
    %v2499 = vrot.slane %v2498, 2
    %v2500 = vadd.f32 %v2498, %v2499
    %v2501 = vrot.slane %v2500, 1
    %v2502 = vadd.f32 %v2500, %v2501
    %v2503 = vadd.f32 %v1773, %v1777
    %v2504 = vrot.slane %v2503, 4
    %v2505 = vadd.f32 %v2503, %v2504
    %v2506 = vrot.slane %v2505, 2
    %v2507 = vadd.f32 %v2505, %v2506
    %v2508 = vrot.slane %v2507, 1
    %v2509 = vadd.f32 %v2507, %v2508
    %v2510 = vadd.f32 %v1774, %v1778
    %v2511 = vrot.slane %v2510, 4
    %v2512 = vadd.f32 %v2510, %v2511
    %v2513 = vrot.slane %v2512, 2
    %v2514 = vadd.f32 %v2512, %v2513
    %v2515 = vrot.slane %v2514, 1
    %v2516 = vadd.f32 %v2514, %v2515
    %v2517 = vadd.f32 %v1775, %v1779
    %v2518 = vrot.slane %v2517, 4
    %v2519 = vadd.f32 %v2517, %v2518
    %v2520 = vrot.slane %v2519, 2
    %v2521 = vadd.f32 %v2519, %v2520
    %v2522 = vrot.slane %v2521, 1
    %v2523 = vadd.f32 %v2521, %v2522
    %v2524 = vadd.f32 %v2502, 0.0
    %2526 = vrot.lane.b32.xlu0 %v2502, 96
    %v2527 = vpop.permute.xlu0 %2526
    %v2529 = vadd.f32 %v2524, %v2527
    %2530 = vrot.lane.b32.xlu0 %v2502, 64
    %v2531 = vpop.permute.xlu0 %2530
    %v2533 = vadd.f32 %v2529, %v2531
    %2534 = vrot.lane.b32.xlu0 %v2502, 32
    %v2535 = vpop.permute.xlu0 %2534
    %v2537 = vadd.f32 %v2533, %v2535
    %v2538 = vadd.f32 %v2537, %v2509
    %2540 = vrot.lane.b32.xlu0 %v2509, 96
    %v2541 = vpop.permute.xlu0 %2540
    %v2543 = vadd.f32 %v2538, %v2541
    %2544 = vrot.lane.b32.xlu0 %v2509, 64
    %v2545 = vpop.permute.xlu0 %2544
    %v2547 = vadd.f32 %v2543, %v2545
    %2548 = vrot.lane.b32.xlu0 %v2509, 32
    %v2549 = vpop.permute.xlu0 %2548
    %v2551 = vadd.f32 %v2547, %v2549
    %v2552 = vadd.f32 %v2551, %v2516
    %2554 = vrot.lane.b32.xlu0 %v2516, 96
    %v2555 = vpop.permute.xlu0 %2554
    %v2557 = vadd.f32 %v2552, %v2555
    %2558 = vrot.lane.b32.xlu0 %v2516, 64
    %v2559 = vpop.permute.xlu0 %2558
    %v2561 = vadd.f32 %v2557, %v2559
    %2562 = vrot.lane.b32.xlu0 %v2516, 32
    %v2563 = vpop.permute.xlu0 %2562
    %v2565 = vadd.f32 %v2561, %v2563
    %v2566 = vadd.f32 %v2565, %v2523
    %2568 = vrot.lane.b32.xlu0 %v2523, 96
    %v2569 = vpop.permute.xlu0 %2568
    %v2571 = vadd.f32 %v2566, %v2569
    %2572 = vrot.lane.b32.xlu0 %v2523, 64
    %v2573 = vpop.permute.xlu0 %2572
    %v2575 = vadd.f32 %v2571, %v2573
    %2576 = vrot.lane.b32.xlu0 %v2523, 32
    %v2577 = vpop.permute.xlu0 %2576
    %v2579 = vadd.f32 %v2575, %v2577
    %v2580 = vmul.f32 %v2579, 0.00390625
    %v2582 = vsel %vm578, %v2580, 0
    %2584 = vmatprep.subr.mxu0 0.0
    %2585 = vmatpush1.msra.mxu0 0.0
    %2586 = vmatprep.subr.mxu0 0.0
    %2587 = vmatpush1.msra.mxu0 0.0
    %2588 = vmatprep.subr.mxu0 0.0
    %2589 = vmatpush1.msra.mxu0 0.0
    %2590 = vmatprep.subr.mxu0 0.0
    %2591 = vmatpush1.msra.mxu0 0.0
    %2592 = vmatprep.subr.mxu0 0.0
    %2593 = vmatpush1.msra.mxu0 0.0
    %2594 = vmatprep.subr.mxu0 0.0
    %2595 = vmatpush1.msra.mxu0 0.0
    %2596 = vmatprep.subr.mxu0 0.0
    %2597 = vmatpush1.msra.mxu0 0.0
    %2598 = vmatprep.subr.mxu0 0.0
    %2599 = vmatpush1.msra.mxu0 0.0
    %2600 = vmatprep.subr.mxu0 0.0
    %2601 = vmatpush1.msra.mxu0 0.0
    %2602 = vmatprep.subr.mxu0 0.0
    %2603 = vmatpush1.msra.mxu0 0.0
    %2604 = vmatprep.subr.mxu0 0.0
    %2605 = vmatpush1.msra.mxu0 0.0
    %2606 = vmatprep.subr.mxu0 0.0
    %2607 = vmatpush1.msra.mxu0 0.0
    %2608 = vmatprep.subr.mxu0 0.0
    %2609 = vmatpush1.msra.mxu0 %v375
    %2610 = vmatprep.subr.mxu0 0.0
    %2611 = vmatpush1.msra.mxu0 %v374
    %2612 = vmatprep.subr.mxu0 0.0
    %2613 = vmatpush1.msra.mxu0 %v373
    %2614 = vmatprep.subr.mxu0 0.0
    %2615 = vmatpush1.msra.mxu0 %v372
    %2616 = vmatprep.subr.mxu0 0.0
    %2617 = vmatpush2.msra.mxu0 0.0
    %2618 = vmatprep.subr.mxu0 0.0
    %2619 = vmatpush2.msra.mxu0 0.0
    %2620 = vmatprep.subr.mxu0 0.0
    %2621 = vmatpush2.msra.mxu0 0.0
    %2622 = vmatprep.subr.mxu0 0.0
    %2623 = vmatpush2.msra.mxu0 0.0
    %2624 = vmatprep.subr.mxu0 0.0
    %2625 = vmatpush2.msra.mxu0 0.0
    %2626 = vmatprep.subr.mxu0 0.0
    %2627 = vmatpush2.msra.mxu0 0.0
    %2628 = vmatprep.subr.mxu0 0.0
    %2629 = vmatpush2.msra.mxu0 0.0
    %2630 = vmatprep.subr.mxu0 0.0
    %2631 = vmatpush2.msra.mxu0 0.0
    %2632 = vmatprep.subr.mxu0 0.0
    %2633 = vmatpush2.msra.mxu0 0.0
    %2634 = vmatprep.subr.mxu0 0.0
    %2635 = vmatpush2.msra.mxu0 0.0
    %2636 = vmatprep.subr.mxu0 0.0
    %2637 = vmatpush2.msra.mxu0 0.0
    %2638 = vmatprep.subr.mxu0 0.0
    %2639 = vmatpush2.msra.mxu0 0.0
    %2640 = vmatprep.subr.mxu0 0.0
    %2641 = vmatpush2.msra.mxu0 0.0
    %2642 = vmatprep.subr.mxu0 0.0
    %2643 = vmatpush2.msra.mxu0 0.0
    %2644 = vmatprep.subr.mxu0 0.0
    %2645 = vmatpush2.msra.mxu0 0.0
    %2646 = vmatprep.subr.mxu0 0.0
    %2647 = vmatpush2.msra.mxu0 0.0
    %2648 = vmatprep.mubr.f32.mxu0 0.0
    %2649 = vmatmul.mubr.f32.gmra.mxu0 %v2582
    %v2650 = vpop.f32.mrf.mxu0
    %v2651 = vadd.f32 %v115, %v2650
    %v2652 = vpop.f32.mrf.mxu0
    %2653 = vdwg.mxu0
    %v2654 = vxor.u32 %v2651, 2147483648
    %v2655 = vmul.f32 %v2654, 1.442695
    %v2656 = vpow.pop %v2655
    %v2657 = vadd.f32 %v2656, 1.0
    %v2658 = vrcp.pop %v2657
    %v2659 = vmul.f32 1.0, %v2658
    %2661 = vrot.lane.b32.xlu0 %v2659, 32
    %v2662 = vpop.permute.xlu0 %2661
    %2664 = vrot.lane.b32.xlu0 %v2659, 64
    %v2665 = vpop.permute.xlu0 %2664
    %2667 = vrot.lane.b32.xlu0 %v2659, 96
    %v2668 = vpop.permute.xlu0 %2667
    %v2670 = vsel %vm578, %v2659, %v2662
    %v2671 = vsel %vm1651, %v2670, %v2665
    %v2672 = vsel %vm685, %v2671, %v2668
    %v2673 = vlaneseq
    %v2674 = vshrl.u32 %v2673, 7
    %v2675 = vsub.s32 0, %v2674
    %v2676 = vrot.slane %v2672, %v2675
    %v2677 = vmul.f32 %v1772, %v2676
    %v2678 = vmul.f32 %v1773, %v2676
    %v2679 = vmul.f32 %v1774, %v2676
    %v2680 = vmul.f32 %v1775, %v2676
    %v2681 = vmul.f32 %v1776, %v2676
    %v2682 = vmul.f32 %v1777, %v2676
    %v2683 = vmul.f32 %v1778, %v2676
    %v2684 = vmul.f32 %v1779, %v2676
    %v2685 = vmul.f32 %v2332, %v2677
    %v2686 = vmul.f32 %v2334, %v2678
    %v2687 = vmul.f32 %v2486, %v2679
    %v2688 = vmul.f32 %v2488, %v2680
    %v2689 = vmul.f32 %v2338, %v2681
    %v2690 = vmul.f32 %v2340, %v2682
    %v2691 = vmul.f32 %v2492, %v2683
    %v2692 = vmul.f32 %v2494, %v2684
    %v2693 = vadd.f32 %v1690, %v2685
    %v2694 = vadd.f32 %v1691, %v2686
    %v2695 = vadd.f32 %v1692, %v2687
    %v2696 = vadd.f32 %v1693, %v2688
    %v2697 = vadd.f32 %v1694, %v2689
    %v2698 = vadd.f32 %v1695, %v2690
    %v2699 = vadd.f32 %v1696, %v2691
    %v2700 = vadd.f32 %v1697, %v2692
    %2701 = vst [vmem:[#allocation13 + $0x40] sm:$0xff] %v2693
    %2702 = vst [vmem:[#allocation13 + $0x48] sm:$0xff] %v2694
    %2703 = vst [vmem:[#allocation13 + $0x50] sm:$0xff] %v2695
    %2704 = vst [vmem:[#allocation13 + $0x58] sm:$0xff] %v2696
    %2705 = vst [vmem:[#allocation13 + $0x60] sm:$0xff] %v2697
    %2706 = vst [vmem:[#allocation13 + $0x68] sm:$0xff] %v2698
    %2707 = vst [vmem:[#allocation13 + $0x70] sm:$0xff] %v2699
    %2708 = vst [vmem:[#allocation13 + $0x78] sm:$0xff] %v2700
    // Predicated region
    $region62: #{tpu_custom_call.1} parent=1 // pred_check
      _
    $region63: #{tpu_custom_call.1} parent=1 // pred_check_branch
      %2710 = sbr.rel (0) target = $region65
    $region64: #{tpu_custom_call.1} parent=1 // pred_region
      %s2712 = ssub.s32 2048, 2048
      %2713 = vsyncadd [#allocation4], %s2712
      %s2714 = sshll.u32 [#allocation13], 4
      %s2715 = int_to_ptr.vmem [resolvable:$true] %s2714
      %2720 = dma.vmem_to_hbm [thread:$0]  %s2715, 2048, %s9, [#allocation4], 512, 512, 32
    $region65: #{tpu_custom_call.1} parent=1 // pred_fallthru
      _
    // Predicated region
    $region66: #{tpu_custom_call.1} parent=1 // pred_check
      _
    $region67: #{tpu_custom_call.1} parent=1 // pred_check_branch
      %2722 = sbr.rel (0) target = $region69
    $region68: #{tpu_custom_call.1} parent=1 // pred_region
      %2723 = dma.done [#allocation4], 2048
    $region69: #{tpu_custom_call.1} parent=1 // pred_fallthru
      _
    %2724 = vsyncpa [#allocation3], 1
    %2725 = vsyncpa [#allocation6], 1
    %2726 = vsyncpa [#allocation9], 1
    %2727 = vsyncpa [#allocation12], 1
    %2728 = vsyncpa [#allocation4], 1

</llo_original>
